<compile_context>
chip_gen: v7x
topology: tpu7x:2x2x1
jax: 0.10.0
libtpu: 0.0.40
codegen_flags: <defaults>
</compile_context>

<pallas_src>
import jax
import jax.numpy as jnp
from jax.experimental import pallas as pl
from jax.experimental.pallas import tpu as pltpu

D_IN = 2        # concatenated [x, dx] feature width
HID = 512
D_OUT = 2
OUT_PAD = 128   # W3 lane-padded once at prep time so layer 3 is a full-lane MXU matmul


def netf_kernel(xdx_ref, w1_ref, w2_ref, w3_ref, o_ref):
    # xdx: (tile_n, 2) f32; w1: (2, HID) f32; w2: (HID, HID) bf16;
    # w3: (HID, OUT_PAD) bf16 (zero-padded cols); o: (tile_n, D_OUT) f32.
    x = xdx_ref[:, 0:1]
    dx = xdx_ref[:, 1:2]

    # Layer 1 (K=2) as a VPU broadcast-multiply-add: exact f32, keeps the MXU free.
    z1 = x * w1_ref[0:1, :] + dx * w1_ref[1:2, :]          # (tile_n, HID) f32

    # tanh on bf16 inputs: the result is consumed as bf16 by the MXU anyway.
    h1 = jnp.tanh(z1.astype(jnp.bfloat16))                 # (tile_n, HID) bf16

    # Layer 2: the only real FLOP sink -> bf16 MXU matmul, f32 accumulation.
    z2 = jnp.dot(h1, w2_ref[...], preferred_element_type=jnp.float32)
    h2 = jnp.tanh(z2.astype(jnp.bfloat16))

    # Layer 3 against the (pre-padded) 128-wide W3; store only the 2 real columns so
    # HBM write traffic is just (tile_n, 2) f32 per step (no padded-output round trip).
    y = jnp.dot(h2, w3_ref[...], preferred_element_type=jnp.float32)  # (tile_n, OUT_PAD)
    o_ref[...] = y[:, :D_OUT]


def prepare_weights(w1, w2, w3):
    """One-time weight prep, hoisted out of the forward path (perf review item 1).

    Returns (w1_f32, w2_bf16, w3_pad_bf16) ready for netf_forward."""
    w1_f32 = w1.astype(jnp.float32)
    w2_bf16 = w2.astype(jnp.bfloat16)
    w3_pad = jnp.pad(w3, ((0, 0), (0, OUT_PAD - w3.shape[1]))).astype(jnp.bfloat16)
    return w1_f32, w2_bf16, w3_pad


def _choose_tile(n):
    # Smallest tile in {128, 256, 512} that minimises padded rows; ties go to the
    # larger tile so long batches amortise the ~0.35 us per-grid-step overhead.
    best_t, best_pad = 128, ((n + 127) // 128) * 128
    for t in (256, 512):
        pad = ((n + t - 1) // t) * t
        if pad <= best_pad:
            best_t, best_pad = t, pad
    return best_t


def netf_forward(x, dx, w1_f32, w2_bf16, w3_pad):
    """x, dx: (N, 1) f32. Weights already prepared via prepare_weights(). Returns (N, 2) f32."""
    n = x.shape[0]
    tile_n = _choose_tile(n)
    n_pad = ((n + tile_n - 1) // tile_n) * tile_n

    inp = jnp.concatenate([x, dx], axis=1)                 # (n, 2) f32, one DMA stream
    if n_pad != n:
        inp = jnp.pad(inp, ((0, n_pad - n), (0, 0)))       # zero rows -> zero outputs

    grid = (n_pad // tile_n,)
    cost = pl.CostEstimate(
        flops=2 * n_pad * HID * (HID + OUT_PAD) + 4 * n_pad * HID,
        transcendentals=2 * n_pad * HID,
        bytes_accessed=(n_pad * D_IN * 4            # merged [x|dx]
                        + D_IN * HID * 4            # w1 (f32)
                        + HID * HID * 2             # w2 (bf16)
                        + HID * OUT_PAD * 2         # w3 padded (bf16)
                        + n_pad * D_OUT * 4),       # real output only
    )

    # Weight blocks use a constant index_map; the extra double buffer Pallas allocates
    # for them (~0.7 MiB) is far below the VMEM limit at these tile sizes, so no
    # pipeline_mode tweaks are needed.
    y = pl.pallas_call(
        netf_kernel,
        out_shape=jax.ShapeDtypeStruct((n_pad, D_OUT), jnp.float32),
        grid_spec=pltpu.PrefetchScalarGridSpec(
            num_scalar_prefetch=0,
            grid=grid,
            in_specs=[
                pl.BlockSpec((tile_n, D_IN), lambda i: (i, 0)),
                pl.BlockSpec((D_IN, HID), lambda i: (0, 0)),
                pl.BlockSpec((HID, HID), lambda i: (0, 0)),
                pl.BlockSpec((HID, OUT_PAD), lambda i: (0, 0)),
            ],
            out_specs=pl.BlockSpec((tile_n, D_OUT), lambda i: (i, 0)),
        ),
        compiler_params=pltpu.CompilerParams(
            dimension_semantics=("parallel",),
        ),
        cost_estimate=cost,
    )(inp, w1_f32, w2_bf16, w3_pad)

    return y[:n] if n_pad != n else y


def init_params(key):
    # PyTorch Linear default init: U(-1/sqrt(fan_in), 1/sqrt(fan_in)), no biases.
    k1, k2, k3 = jax.random.split(key, 3)
    b1 = 1.0 / (D_IN ** 0.5)
    b2 = 1.0 / (HID ** 0.5)
    w1 = jax.random.uniform(k1, (D_IN, HID), jnp.float32, -b1, b1)
    w2 = jax.random.uniform(k2, (HID, HID), jnp.float32, -b2, b2)
    w3 = jax.random.uniform(k3, (HID, D_OUT), jnp.float32, -b2, b2)
    return w1, w2, w3


if __name__ == "__main__":
    key = jax.random.PRNGKey(0)
    kp, kx, kdx = jax.random.split(key, 3)
    w1, w2, w3 = init_params(kp)
    w1p, w2p, w3p = prepare_weights(w1, w2, w3)   # one-time prep (hoisted out of forward)

    N = 300  # not a multiple of the tile: exercises the ragged-batch path (tile 128, grid 3)
    x = jax.random.normal(kx, (N, 1), jnp.float32)
    dx = jax.random.normal(kdx, (N, 1), jnp.float32)

    netf = jax.jit(netf_forward)
    y = jax.block_until_ready(netf(x, dx, w1p, w2p, w3p))
    assert y.shape == (N, D_OUT)

    # Reference matching the kernel's precision contract
    # (exact f32 layer 1, bf16 tanh inputs, bf16 MXU layers 2/3 with f32 accumulation).
    z1 = x * w1[0:1, :] + dx * w1[1:2, :]
    h1 = jnp.tanh(z1.astype(jnp.bfloat16))
    z2 = jnp.dot(h1, w2.astype(jnp.bfloat16), preferred_element_type=jnp.float32)
    h2 = jnp.tanh(z2.astype(jnp.bfloat16))
    y_ref = jnp.dot(h2, w3.astype(jnp.bfloat16), preferred_element_type=jnp.float32)
    assert jnp.allclose(y, y_ref, atol=5e-3, rtol=5e-3), float(jnp.max(jnp.abs(y - y_ref)))

    # Loose sanity check against the pure-f32 PyTorch-semantics reference.
    inp = jnp.concatenate([x, dx], axis=1)
    y_f32 = jnp.tanh(jnp.tanh(inp @ w1) @ w2) @ w3
    assert jnp.allclose(y, y_f32, atol=1e-1, rtol=1e-1)

    print("KERNEL_OK")
</pallas_src>

<mosaic_0001>
module attributes {stable_mosaic.version = 11 : i64} {
  func.func @netf_kernel(%arg0: i32, %arg1: memref<128x2xf32, #tpu.memory_space<vmem>>, %arg2: memref<2x512xf32, #tpu.memory_space<vmem>>, %arg3: memref<512x512xbf16, #tpu.memory_space<vmem>>, %arg4: memref<512x128xbf16, #tpu.memory_space<vmem>>, %arg5: memref<128x2xf32, #tpu.memory_space<vmem>>) attributes {dimension_semantics = [#tpu.dimension_semantics<parallel>], iteration_bounds = array<i64: 3>, scalar_prefetch = 0 : i64, scratch_operands = 0 : i64, tpu.core_type = #tpu.core_type<tc>, window_params = [{transform_indices = @transform_0, window_bounds = array<i64: 128, 2>}, {pipeline_mode = #tpu.pipeline_mode<synchronous>, transform_indices = @transform_1, window_bounds = array<i64: 2, 512>}, {pipeline_mode = #tpu.pipeline_mode<synchronous>, transform_indices = @transform_2, window_bounds = array<i64: 512, 512>}, {pipeline_mode = #tpu.pipeline_mode<synchronous>, transform_indices = @transform_3, window_bounds = array<i64: 512, 128>}, {transform_indices = @transform_4, window_bounds = array<i64: 128, 2>}]} {
    %c0 = arith.constant 0 : index
    %c0_0 = arith.constant 0 : index
    %0 = vector.load %arg1[%c0, %c0_0] : memref<128x2xf32, #tpu.memory_space<vmem>>, vector<128x1xf32>
    %c0_1 = arith.constant 0 : index
    %c1 = arith.constant 1 : index
    %1 = vector.load %arg1[%c0_1, %c1] : memref<128x2xf32, #tpu.memory_space<vmem>>, vector<128x1xf32>
    %c0_2 = arith.constant 0 : index
    %c0_3 = arith.constant 0 : index
    %2 = vector.load %arg2[%c0_2, %c0_3] : memref<2x512xf32, #tpu.memory_space<vmem>>, vector<1x512xf32>
    %3 = vector.broadcast %0 : vector<128x1xf32> to vector<128x512xf32>
    %4 = vector.broadcast %2 : vector<1x512xf32> to vector<128x512xf32>
    %5 = arith.mulf %3, %4 : vector<128x512xf32>
    %c1_4 = arith.constant 1 : index
    %c0_5 = arith.constant 0 : index
    %6 = vector.load %arg2[%c1_4, %c0_5] : memref<2x512xf32, #tpu.memory_space<vmem>>, vector<1x512xf32>
    %7 = vector.broadcast %1 : vector<128x1xf32> to vector<128x512xf32>
    %8 = vector.broadcast %6 : vector<1x512xf32> to vector<128x512xf32>
    %9 = arith.mulf %7, %8 : vector<128x512xf32>
    %10 = arith.addf %5, %9 : vector<128x512xf32>
    %11 = arith.truncf %10 : vector<128x512xf32> to vector<128x512xbf16>
    %12 = math.tanh %11 : vector<128x512xbf16>
    %c0_6 = arith.constant 0 : index
    %c0_7 = arith.constant 0 : index
    %13 = vector.load %arg3[%c0_6, %c0_7] : memref<512x512xbf16, #tpu.memory_space<vmem>>, vector<512x512xbf16>
    %cst = arith.constant dense<0.000000e+00> : vector<128x512xf32>
    %14 = tpu.matmul %12, %13, %cst {dimension_numbers = #tpu.dot_dimension_numbers<[1], [0], [0], [1], [0, 0, 1, 1], [], []>} : vector<128x512xbf16>, vector<512x512xbf16>, vector<128x512xf32> -> vector<128x512xf32>
    %15 = arith.truncf %14 : vector<128x512xf32> to vector<128x512xbf16>
    %16 = math.tanh %15 : vector<128x512xbf16>
    %c0_8 = arith.constant 0 : index
    %c0_9 = arith.constant 0 : index
    %17 = vector.load %arg4[%c0_8, %c0_9] : memref<512x128xbf16, #tpu.memory_space<vmem>>, vector<512x128xbf16>
    %cst_10 = arith.constant dense<0.000000e+00> : vector<128x128xf32>
    %18 = tpu.matmul %16, %17, %cst_10 {dimension_numbers = #tpu.dot_dimension_numbers<[1], [0], [0], [1], [0, 0, 1, 1], [], []>} : vector<128x512xbf16>, vector<512x128xbf16>, vector<128x128xf32> -> vector<128x128xf32>
    %19 = vector.extract_strided_slice %18 {offsets = [0, 0], sizes = [128, 2], strides = [1, 1]} : vector<128x128xf32> to vector<128x2xf32>
    %c0_11 = arith.constant 0 : index
    %c0_12 = arith.constant 0 : index
    %20 = vector.load %arg5[%c0_11, %c0_12] : memref<128x2xf32, #tpu.memory_space<vmem>>, vector<128x2xf32>
    tpu.vector_store %arg5[%c0_11, %c0_12], %19 {strides = array<i32>} : memref<128x2xf32, #tpu.memory_space<vmem>>, vector<128x2xf32>,
    return
  }
  func.func @transform_0(%arg0: i32) -> (i32, i32) {
    %c0_i32 = arith.constant 0 : i32
    %c0_i32_0 = arith.constant 0 : i32
    return %arg0, %c0_i32 : i32, i32
  }
  func.func @transform_1(%arg0: i32) -> (i32, i32) {
    %c0_i32 = arith.constant 0 : i32
    %c0_i32_0 = arith.constant 0 : i32
    %c0_i32_1 = arith.constant 0 : i32
    return %c0_i32, %c0_i32_0 : i32, i32
  }
  func.func @transform_2(%arg0: i32) -> (i32, i32) {
    %c0_i32 = arith.constant 0 : i32
    %c0_i32_0 = arith.constant 0 : i32
    %c0_i32_1 = arith.constant 0 : i32
    return %c0_i32, %c0_i32_0 : i32, i32
  }
  func.func @transform_3(%arg0: i32) -> (i32, i32) {
    %c0_i32 = arith.constant 0 : i32
    %c0_i32_0 = arith.constant 0 : i32
    %c0_i32_1 = arith.constant 0 : i32
    return %c0_i32, %c0_i32_0 : i32, i32
  }
  func.func @transform_4(%arg0: i32) -> (i32, i32) {
    %c0_i32 = arith.constant 0 : i32
    %c0_i32_0 = arith.constant 0 : i32
    return %arg0, %c0_i32 : i32, i32
  }
}

</mosaic_0001>

<llo_original>
// kernel: netf_forward.1
$region0: #{netf_forward.1}
  #allocation0 [shape = 'u32[]', space=smem, size = 0x4, offset = 0x4, fixed_abs, tag = 'smem constant byte address 0x4 - core index']
  #allocation1 [shape = 'u32[144,128]{1,0:T(1,128)}', space=vmem, size = 0x12000, scoped, tag = 'internal scratch']
  %s0 = inlined_call_operand.vmem [shape: f32[384,2], index: 0, kind: input, shape index: {}]
  %s1 = inlined_call_operand.vmem [shape: f32[2,512], index: 1, kind: input, shape index: {}]
  %s2 = inlined_call_operand.hbm [shape: bf16[512,512], index: 2, kind: input, shape index: {}]
  %s3 = inlined_call_operand.vmem [shape: bf16[512,128], index: 3, kind: input, shape index: {}]
  %s4 = inlined_call_operand.vmem [shape: f32[384,2], index: 4, kind: output, shape index: {}]
  %s5 = sld [smem:[#allocation0]]
  $region53: #{netf_forward.1} parent=0
    _
  %s7 = ssub.s32 1, %s5
  %s8 = scalar_select 0, %s7, %s5
  $region1: #{netf_forward.1} parent=0
    #allocation2 [shape = 'u8[524288]{0}', space=vmem, size = 0x80000, scoped, tag = 'input window, operand 2, single buffered']
    #allocation3 [shape = 's32[2]{0}', space=sflag, size = 0x8, scoped, tag = 'scoped memory for netf_forward.1']
    %9 = vsyncpa [#allocation3], 0
    loop: start=0, step=1, limit=5
    $region2: #{netf_forward.1} parent=1 // loop_pre_header
      _
    $region3: #{netf_forward.1} parent=1 // loop_header
      %s11 = sphi 0, %s15
      %p12 = scmp.ge.s32.totalorder %s11, 5
      %s21 = sphi 0, %s23
      %s24 = sphi 0, %s21
      %s25 = sphi 0, %s24
      %s41 = sphi 0, %s25
      %s45 = sphi 0, %s45
      %s47 = sphi 0, %s45
      %s48 = sphi 0, %s47
      %s62 = sphi 0, %s48
      %s66 = sphi 0, %s66
      %s68 = sphi 0, %s66
      %s69 = sphi 0, %s68
      %s83 = sphi 0, %s69
      %s87 = sphi 0, %s87
      %s89 = sphi 0, %s87
      %s90 = sphi 0, %s89
      %s104 = sphi 0, %s90
      %s110 = sphi 0, %s112
      %s113 = sphi 0, %s110
      %s114 = sphi 0, %s113
      %s130 = sphi 0, %s114
    $region4: #{netf_forward.1} parent=1 // loop_header_branch
      %14 = sbr.rel (%p12) target = $region8
    $region5: #{netf_forward.1} parent=1 // loop_body
      %s16 = ssub.s32 %s11, 1
      %s17 = ssub.s32 %s11, 2
      %s18 = sadd.s32 %s11, 1
      %s19 = ssub.s32 %s11, %s18
      %p20 = scmp.eq.s32.totalorder %s19, 0
      %s22 = sadd.s32 %s21, 1
      %s23 = scalar_select %p20, %s21, %s22
      %p26 = pneg %p20
      %p27 = scmp.eq.s32.totalorder %s11, 2
      %p28 = por %p26, %p27
      %p29 = scmp.ne.s32.totalorder %s21, %s24
      %p30 = scmp.eq.s32.totalorder %s11, 0
      %p31 = por %p29, %p30
      %p32 = scmp.ne.s32.totalorder %s21, %s24
      %p33 = scmp.eq.s32.totalorder %s16, 2
      %p34 = por %p32, %p33
      %p35 = scmp.ne.s32.totalorder %s24, %s25
      %p36 = scmp.eq.s32.totalorder %s16, 0
      %p37 = por %p35, %p36
      %p38 = scmp.ne.s32.totalorder %s24, %s25
      %p39 = scmp.eq.s32.totalorder %s17, 2
      %p40 = por %p38, %p39
      %p42 = scmp.ne.s32.totalorder %s25, %s41
      %p43 = scmp.eq.s32.totalorder %s17, 0
      %p44 = por %p42, %p43
      %s46 = sadd.s32 %s45, 1
      %p49 = scmp.eq.s32.totalorder %s11, 2
      %p50 = scmp.ne.s32.totalorder %s45, %s47
      %p51 = scmp.eq.s32.totalorder %s11, 0
      %p52 = por %p50, %p51
      %p53 = scmp.ne.s32.totalorder %s45, %s47
      %p54 = scmp.eq.s32.totalorder %s16, 2
      %p55 = por %p53, %p54
      %p56 = scmp.ne.s32.totalorder %s47, %s48
      %p57 = scmp.eq.s32.totalorder %s16, 0
      %p58 = por %p56, %p57
      %p59 = scmp.ne.s32.totalorder %s47, %s48
      %p60 = scmp.eq.s32.totalorder %s17, 2
      %p61 = por %p59, %p60
      %p63 = scmp.ne.s32.totalorder %s48, %s62
      %p64 = scmp.eq.s32.totalorder %s17, 0
      %p65 = por %p63, %p64
      %s67 = sadd.s32 %s66, 1
      %p70 = scmp.eq.s32.totalorder %s11, 2
      %p71 = scmp.ne.s32.totalorder %s66, %s68
      %p72 = scmp.eq.s32.totalorder %s11, 0
      %p73 = por %p71, %p72
      %p74 = scmp.ne.s32.totalorder %s66, %s68
      %p75 = scmp.eq.s32.totalorder %s16, 2
      %p76 = por %p74, %p75
      %p77 = scmp.ne.s32.totalorder %s68, %s69
      %p78 = scmp.eq.s32.totalorder %s16, 0
      %p79 = por %p77, %p78
      %p80 = scmp.ne.s32.totalorder %s68, %s69
      %p81 = scmp.eq.s32.totalorder %s17, 2
      %p82 = por %p80, %p81
      %p84 = scmp.ne.s32.totalorder %s69, %s83
      %p85 = scmp.eq.s32.totalorder %s17, 0
      %p86 = por %p84, %p85
      %s88 = sadd.s32 %s87, 1
      %p91 = scmp.eq.s32.totalorder %s11, 2
      %p92 = scmp.ne.s32.totalorder %s87, %s89
      %p93 = scmp.eq.s32.totalorder %s11, 0
      %p94 = por %p92, %p93
      %p95 = scmp.ne.s32.totalorder %s87, %s89
      %p96 = scmp.eq.s32.totalorder %s16, 2
      %p97 = por %p95, %p96
      %p98 = scmp.ne.s32.totalorder %s89, %s90
      %p99 = scmp.eq.s32.totalorder %s16, 0
      %p100 = por %p98, %p99
      %p101 = scmp.ne.s32.totalorder %s89, %s90
      %p102 = scmp.eq.s32.totalorder %s17, 2
      %p103 = por %p101, %p102
      %p105 = scmp.ne.s32.totalorder %s90, %s104
      %p106 = scmp.eq.s32.totalorder %s17, 0
      %p107 = por %p105, %p106
      %s108 = ssub.s32 %s11, %s18
      %p109 = scmp.eq.s32.totalorder %s108, 0
      %s111 = sadd.s32 %s110, 1
      %s112 = scalar_select %p109, %s110, %s111
      %p115 = pneg %p109
      %p116 = scmp.eq.s32.totalorder %s11, 2
      %p117 = por %p115, %p116
      %p118 = scmp.ne.s32.totalorder %s110, %s113
      %p119 = scmp.eq.s32.totalorder %s11, 0
      %p120 = por %p118, %p119
      %p121 = scmp.ne.s32.totalorder %s110, %s113
      %p122 = scmp.eq.s32.totalorder %s16, 2
      %p123 = por %p121, %p122
      %p124 = scmp.ne.s32.totalorder %s113, %s114
      %p125 = scmp.eq.s32.totalorder %s16, 0
      %p126 = por %p124, %p125
      %p127 = scmp.ne.s32.totalorder %s113, %s114
      %p128 = scmp.eq.s32.totalorder %s17, 2
      %p129 = por %p127, %p128
      %p131 = scmp.ne.s32.totalorder %s114, %s130
      %p132 = scmp.eq.s32.totalorder %s17, 0
      %p133 = por %p131, %p132
      %p134 = scmp.le.s32.totalorder 1, %s11
      %p135 = scmp.lt.s32.totalorder %s11, 4
      %p136 = pnand %p134, %p135
      %p137 = pneg %p136
      // Predicated region
      $region9: #{netf_forward.1} parent=5 // pred_check
        _
      $region10: #{netf_forward.1} parent=5 // pred_check_branch
        %139 = sbr.rel (%p136) target = $region12
      $region11: #{netf_forward.1} parent=5 // pred_region
        %s140 = ssub.s32 %s11, 1
        // Predicated region
        $region13: #{netf_forward.1} parent=11 // pred_check
          %p141 = pneg %p58
        $region14: #{netf_forward.1} parent=11 // pred_check_branch
          %143 = sbr.rel (%p141) target = $region16
        $region15: #{netf_forward.1} parent=11 // pred_region
          _
        $region16: #{netf_forward.1} parent=11 // pred_fallthru
          _
        // Predicated region
        $region17: #{netf_forward.1} parent=11 // pred_check
          %p144 = pneg %p79
        $region18: #{netf_forward.1} parent=11 // pred_check_branch
          %146 = sbr.rel (%p144) target = $region20
        $region19: #{netf_forward.1} parent=11 // pred_region
          %s148 = ssub.s32 16384, 16384
          %149 = vsyncadd [#allocation3], %s148
          %s150 = sshll.u32 [#allocation2], 4
          %s151 = int_to_ptr.vmem [resolvable:$true] %s150
          %156 = dma.hbm_to_vmem [thread:$0]  %s2, 16384, %s151, [#allocation3], 256, 256, 16
        $region20: #{netf_forward.1} parent=11 // pred_fallthru
          _
        // Predicated region
        $region21: #{netf_forward.1} parent=11 // pred_check
          %p157 = pneg %p100
        $region22: #{netf_forward.1} parent=11 // pred_check_branch
          %159 = sbr.rel (%p157) target = $region24
        $region23: #{netf_forward.1} parent=11 // pred_region
          _
        $region24: #{netf_forward.1} parent=11 // pred_fallthru
          _
      $region12: #{netf_forward.1} parent=5 // pred_fallthru
        _
      %p160 = scmp.lt.s32.totalorder %s11, 3
      // Predicated region
      $region25: #{netf_forward.1} parent=5 // pred_check
        %p161 = pneg %p160
      $region26: #{netf_forward.1} parent=5 // pred_check_branch
        %163 = sbr.rel (%p161) target = $region28
      $region27: #{netf_forward.1} parent=5 // pred_region
        // Predicated region
        $region29: #{netf_forward.1} parent=27 // pred_check
          %p164 = pneg %p31
        $region30: #{netf_forward.1} parent=27 // pred_check_branch
          %166 = sbr.rel (%p164) target = $region32
        $region31: #{netf_forward.1} parent=27 // pred_region
          %s167 = smul.u32 16, %s11
          %p168 = scmp.lt.s32.totalorder %s167, 47
          %s169 = scalar_select %p168, %s167, 47
          %s170 = smul.addr %s169, 8
          %s171 = scalar_lea.vmem %s0, %s170
          %s172 = smul.u32 16, %s11
        $region32: #{netf_forward.1} parent=27 // pred_fallthru
          _
      $region28: #{netf_forward.1} parent=5 // pred_fallthru
        _
      %p173 = scmp.le.s32.totalorder 1, %s11
      %p174 = scmp.lt.s32.totalorder %s11, 4
      %p175 = pnand %p173, %p174
      %p176 = pneg %p175
      // Predicated region
      $region33: #{netf_forward.1} parent=5 // pred_check
        _
      $region34: #{netf_forward.1} parent=5 // pred_check_branch
        %178 = sbr.rel (%p175) target = $region36
      $region35: #{netf_forward.1} parent=5 // pred_region
        %s179 = ssub.s32 %s11, 1
        // Predicated region
        $region37: #{netf_forward.1} parent=35 // pred_check
          %p180 = pneg %p79
        $region38: #{netf_forward.1} parent=35 // pred_check_branch
          %182 = sbr.rel (%p180) target = $region40
        $region39: #{netf_forward.1} parent=35 // pred_region
          %183 = dma.done [#allocation3], 16384
        $region40: #{netf_forward.1} parent=35 // pred_fallthru
          _
        %s184 = smul.u32 16, %s16
        %p185 = scmp.lt.s32.totalorder %s184, 47
        %s186 = scalar_select %p185, %s184, 47
        %s187 = smul.addr %s186, 8
        %s188 = scalar_lea.vmem %s0, %s187
        %p189 = pneg %p37
        %p190 = pneg %p34
        %p191 = pneg %p58
        %p192 = pneg %p55
        %p193 = pneg %p79
        %p194 = pneg %p76
        %p195 = pneg %p100
        %p196 = pneg %p97
        %p197 = pneg %p126
        %p198 = pneg %p123
        %s199 = smul.u32 16, %s16
        %p200 = scmp.lt.s32.totalorder %s199, 47
        %s201 = scalar_select %p200, %s199, 47
        %s202 = smul.addr %s201, 8
        %s203 = scalar_lea.vmem %s4, %s202
        %s204 = smul.u32 16, %s16
        %p205 = scmp.lt.s32.totalorder %s204, 47
        %s206 = scalar_select %p205, %s204, 47
        %s207 = smul.addr %s206, 8
        %s208 = scalar_lea.vmem %s0, %s207
        %s209 = smul.u32 16, %s16
        %s210 = smul.u32 16, %s16
        %p211 = scmp.lt.s32.totalorder %s210, 47
        %s212 = scalar_select %p211, %s210, 47
        %s213 = smul.addr %s212, 8
        %s214 = scalar_lea.vmem %s4, %s213
        %s215 = smul.u32 16, %s16
        %v217 = vld [vmem:[%s208] sm:$0xff]
        %v218 = vld [vmem:[%s208 + $0x8] sm:$0xff]
        %v219 = vld [vmem:[%s208 + $0x10] sm:$0xff]
        %v220 = vld [vmem:[%s208 + $0x18] sm:$0xff]
        %v221 = vld [vmem:[%s208 + $0x20] sm:$0xff]
        %v222 = vld [vmem:[%s208 + $0x28] sm:$0xff]
        %v223 = vld [vmem:[%s208 + $0x30] sm:$0xff]
        %v224 = vld [vmem:[%s208 + $0x38] sm:$0xff]
        %v225 = vld [vmem:[%s208 + $0x40] sm:$0xff]
        %v226 = vld [vmem:[%s208 + $0x48] sm:$0xff]
        %v227 = vld [vmem:[%s208 + $0x50] sm:$0xff]
        %v228 = vld [vmem:[%s208 + $0x58] sm:$0xff]
        %v229 = vld [vmem:[%s208 + $0x60] sm:$0xff]
        %v230 = vld [vmem:[%s208 + $0x68] sm:$0xff]
        %v231 = vld [vmem:[%s208 + $0x70] sm:$0xff]
        %v232 = vld [vmem:[%s208 + $0x78] sm:$0xff]
        %v233 = vld [vmem:[%s1] ss:$2 sm:$0xf]
        %235 = vset.pattern.permute.xlu0 0
        %236 = vperm.xlu0 %235, %v217
        %v237 = vpop.permute.xlu0 %236
        %240 = vset.pattern.permute.xlu0 0
        %241 = vperm.xlu0 %240, %v218
        %v242 = vpop.permute.xlu0 %241
        %245 = vset.pattern.permute.xlu0 0
        %246 = vperm.xlu0 %245, %v219
        %v247 = vpop.permute.xlu0 %246
        %250 = vset.pattern.permute.xlu0 0
        %251 = vperm.xlu0 %250, %v220
        %v252 = vpop.permute.xlu0 %251
        %255 = vset.pattern.permute.xlu0 0
        %256 = vperm.xlu0 %255, %v221
        %v257 = vpop.permute.xlu0 %256
        %260 = vset.pattern.permute.xlu0 0
        %261 = vperm.xlu0 %260, %v222
        %v262 = vpop.permute.xlu0 %261
        %265 = vset.pattern.permute.xlu0 0
        %266 = vperm.xlu0 %265, %v223
        %v267 = vpop.permute.xlu0 %266
        %270 = vset.pattern.permute.xlu0 0
        %271 = vperm.xlu0 %270, %v224
        %v272 = vpop.permute.xlu0 %271
        %275 = vset.pattern.permute.xlu0 0
        %276 = vperm.xlu0 %275, %v225
        %v277 = vpop.permute.xlu0 %276
        %280 = vset.pattern.permute.xlu0 0
        %281 = vperm.xlu0 %280, %v226
        %v282 = vpop.permute.xlu0 %281
        %285 = vset.pattern.permute.xlu0 0
        %286 = vperm.xlu0 %285, %v227
        %v287 = vpop.permute.xlu0 %286
        %290 = vset.pattern.permute.xlu0 0
        %291 = vperm.xlu0 %290, %v228
        %v292 = vpop.permute.xlu0 %291
        %295 = vset.pattern.permute.xlu0 0
        %296 = vperm.xlu0 %295, %v229
        %v297 = vpop.permute.xlu0 %296
        %300 = vset.pattern.permute.xlu0 0
        %301 = vperm.xlu0 %300, %v230
        %v302 = vpop.permute.xlu0 %301
        %305 = vset.pattern.permute.xlu0 0
        %306 = vperm.xlu0 %305, %v231
        %v307 = vpop.permute.xlu0 %306
        %310 = vset.pattern.permute.xlu0 0
        %311 = vperm.xlu0 %310, %v232
        %v312 = vpop.permute.xlu0 %311
        %v315 = vlaneseq
        %v316 = vshrl.u32 %v315, 7
        %v317 = vsub.s32 0, %v316
        %v318 = vrot.slane %v233, %v317
        %v319 = vlaneseq
        %v320 = vshrl.u32 %v319, 7
        %v321 = vsub.s32 1, %v320
        %v322 = vrot.slane %v233, %v321
        %v323 = vlaneseq
        %v324 = vshrl.u32 %v323, 7
        %v325 = vsub.s32 2, %v324
        %v326 = vrot.slane %v233, %v325
        %v327 = vlaneseq
        %v328 = vshrl.u32 %v327, 7
        %v329 = vsub.s32 3, %v328
        %v330 = vrot.slane %v233, %v329
        %v335 = vmul.f32 %v237, %v318
        %v336 = vmul.f32 %v237, %v322
        %v337 = vmul.f32 %v237, %v326
        %v338 = vmul.f32 %v237, %v330
        %v339 = vmul.f32 %v242, %v318
        %v340 = vmul.f32 %v242, %v322
        %v341 = vmul.f32 %v242, %v326
        %v342 = vmul.f32 %v242, %v330
        %v343 = vmul.f32 %v247, %v318
        %v344 = vmul.f32 %v247, %v322
        %v345 = vmul.f32 %v247, %v326
        %v346 = vmul.f32 %v247, %v330
        %v347 = vmul.f32 %v252, %v318
        %v348 = vmul.f32 %v252, %v322
        %v349 = vmul.f32 %v252, %v326
        %v350 = vmul.f32 %v252, %v330
        %v351 = vmul.f32 %v257, %v318
        %v352 = vmul.f32 %v257, %v322
        %v353 = vmul.f32 %v257, %v326
        %v354 = vmul.f32 %v257, %v330
        %v355 = vmul.f32 %v262, %v318
        %v356 = vmul.f32 %v262, %v322
        %v357 = vmul.f32 %v262, %v326
        %v358 = vmul.f32 %v262, %v330
        %v359 = vmul.f32 %v267, %v318
        %v360 = vmul.f32 %v267, %v322
        %v361 = vmul.f32 %v267, %v326
        %v362 = vmul.f32 %v267, %v330
        %v363 = vmul.f32 %v272, %v318
        %v364 = vmul.f32 %v272, %v322
        %v365 = vmul.f32 %v272, %v326
        %v366 = vmul.f32 %v272, %v330
        %v367 = vmul.f32 %v277, %v318
        %v368 = vmul.f32 %v277, %v322
        %v369 = vmul.f32 %v277, %v326
        %v370 = vmul.f32 %v277, %v330
        %v371 = vmul.f32 %v282, %v318
        %v372 = vmul.f32 %v282, %v322
        %v373 = vmul.f32 %v282, %v326
        %v374 = vmul.f32 %v282, %v330
        %v375 = vmul.f32 %v287, %v318
        %v376 = vmul.f32 %v287, %v322
        %v377 = vmul.f32 %v287, %v326
        %v378 = vmul.f32 %v287, %v330
        %v379 = vmul.f32 %v292, %v318
        %v380 = vmul.f32 %v292, %v322
        %v381 = vmul.f32 %v292, %v326
        %v382 = vmul.f32 %v292, %v330
        %v383 = vmul.f32 %v297, %v318
        %v384 = vmul.f32 %v297, %v322
        %v385 = vmul.f32 %v297, %v326
        %v386 = vmul.f32 %v297, %v330
        %v387 = vmul.f32 %v302, %v318
        %v388 = vmul.f32 %v302, %v322
        %v389 = vmul.f32 %v302, %v326
        %v390 = vmul.f32 %v302, %v330
        %v391 = vmul.f32 %v307, %v318
        %v392 = vmul.f32 %v307, %v322
        %v393 = vmul.f32 %v307, %v326
        %v394 = vmul.f32 %v307, %v330
        %v395 = vmul.f32 %v312, %v318
        %v396 = vmul.f32 %v312, %v322
        %v397 = vmul.f32 %v312, %v326
        %v398 = vmul.f32 %v312, %v330
        %s399 = scalar_lea.vmem %s1, 1
        %v400 = vld [vmem:[%s399] ss:$2 sm:$0xf]
        %401 = vset.pattern.permute.xlu0 1
        %402 = vperm.xlu0 %401, %v217
        %v403 = vpop.permute.xlu0 %402
        %405 = vset.pattern.permute.xlu0 1
        %406 = vperm.xlu0 %405, %v218
        %v407 = vpop.permute.xlu0 %406
        %409 = vset.pattern.permute.xlu0 1
        %410 = vperm.xlu0 %409, %v219
        %v411 = vpop.permute.xlu0 %410
        %413 = vset.pattern.permute.xlu0 1
        %414 = vperm.xlu0 %413, %v220
        %v415 = vpop.permute.xlu0 %414
        %417 = vset.pattern.permute.xlu0 1
        %418 = vperm.xlu0 %417, %v221
        %v419 = vpop.permute.xlu0 %418
        %421 = vset.pattern.permute.xlu0 1
        %422 = vperm.xlu0 %421, %v222
        %v423 = vpop.permute.xlu0 %422
        %425 = vset.pattern.permute.xlu0 1
        %426 = vperm.xlu0 %425, %v223
        %v427 = vpop.permute.xlu0 %426
        %429 = vset.pattern.permute.xlu0 1
        %430 = vperm.xlu0 %429, %v224
        %v431 = vpop.permute.xlu0 %430
        %433 = vset.pattern.permute.xlu0 1
        %434 = vperm.xlu0 %433, %v225
        %v435 = vpop.permute.xlu0 %434
        %437 = vset.pattern.permute.xlu0 1
        %438 = vperm.xlu0 %437, %v226
        %v439 = vpop.permute.xlu0 %438
        %441 = vset.pattern.permute.xlu0 1
        %442 = vperm.xlu0 %441, %v227
        %v443 = vpop.permute.xlu0 %442
        %445 = vset.pattern.permute.xlu0 1
        %446 = vperm.xlu0 %445, %v228
        %v447 = vpop.permute.xlu0 %446
        %449 = vset.pattern.permute.xlu0 1
        %450 = vperm.xlu0 %449, %v229
        %v451 = vpop.permute.xlu0 %450
        %453 = vset.pattern.permute.xlu0 1
        %454 = vperm.xlu0 %453, %v230
        %v455 = vpop.permute.xlu0 %454
        %457 = vset.pattern.permute.xlu0 1
        %458 = vperm.xlu0 %457, %v231
        %v459 = vpop.permute.xlu0 %458
        %461 = vset.pattern.permute.xlu0 1
        %462 = vperm.xlu0 %461, %v232
        %v463 = vpop.permute.xlu0 %462
        %v466 = vlaneseq
        %v467 = vshrl.u32 %v466, 7
        %v468 = vsub.s32 0, %v467
        %v469 = vrot.slane %v400, %v468
        %v470 = vlaneseq
        %v471 = vshrl.u32 %v470, 7
        %v472 = vsub.s32 1, %v471
        %v473 = vrot.slane %v400, %v472
        %v474 = vlaneseq
        %v475 = vshrl.u32 %v474, 7
        %v476 = vsub.s32 2, %v475
        %v477 = vrot.slane %v400, %v476
        %v478 = vlaneseq
        %v479 = vshrl.u32 %v478, 7
        %v480 = vsub.s32 3, %v479
        %v481 = vrot.slane %v400, %v480
        %v486 = vmul.f32 %v403, %v469
        %v487 = vmul.f32 %v403, %v473
        %v488 = vmul.f32 %v403, %v477
        %v489 = vmul.f32 %v403, %v481
        %v490 = vmul.f32 %v407, %v469
        %v491 = vmul.f32 %v407, %v473
        %v492 = vmul.f32 %v407, %v477
        %v493 = vmul.f32 %v407, %v481
        %v494 = vmul.f32 %v411, %v469
        %v495 = vmul.f32 %v411, %v473
        %v496 = vmul.f32 %v411, %v477
        %v497 = vmul.f32 %v411, %v481
        %v498 = vmul.f32 %v415, %v469
        %v499 = vmul.f32 %v415, %v473
        %v500 = vmul.f32 %v415, %v477
        %v501 = vmul.f32 %v415, %v481
        %v502 = vmul.f32 %v419, %v469
        %v503 = vmul.f32 %v419, %v473
        %v504 = vmul.f32 %v419, %v477
        %v505 = vmul.f32 %v419, %v481
        %v506 = vmul.f32 %v423, %v469
        %v507 = vmul.f32 %v423, %v473
        %v508 = vmul.f32 %v423, %v477
        %v509 = vmul.f32 %v423, %v481
        %v510 = vmul.f32 %v427, %v469
        %v511 = vmul.f32 %v427, %v473
        %v512 = vmul.f32 %v427, %v477
        %v513 = vmul.f32 %v427, %v481
        %v514 = vmul.f32 %v431, %v469
        %v515 = vmul.f32 %v431, %v473
        %v516 = vmul.f32 %v431, %v477
        %v517 = vmul.f32 %v431, %v481
        %v518 = vmul.f32 %v435, %v469
        %v519 = vmul.f32 %v435, %v473
        %v520 = vmul.f32 %v435, %v477
        %v521 = vmul.f32 %v435, %v481
        %v522 = vmul.f32 %v439, %v469
        %v523 = vmul.f32 %v439, %v473
        %v524 = vmul.f32 %v439, %v477
        %v525 = vmul.f32 %v439, %v481
        %v526 = vmul.f32 %v443, %v469
        %v527 = vmul.f32 %v443, %v473
        %v528 = vmul.f32 %v443, %v477
        %v529 = vmul.f32 %v443, %v481
        %v530 = vmul.f32 %v447, %v469
        %v531 = vmul.f32 %v447, %v473
        %v532 = vmul.f32 %v447, %v477
        %v533 = vmul.f32 %v447, %v481
        %v534 = vmul.f32 %v451, %v469
        %v535 = vmul.f32 %v451, %v473
        %v536 = vmul.f32 %v451, %v477
        %v537 = vmul.f32 %v451, %v481
        %v538 = vmul.f32 %v455, %v469
        %v539 = vmul.f32 %v455, %v473
        %v540 = vmul.f32 %v455, %v477
        %v541 = vmul.f32 %v455, %v481
        %v542 = vmul.f32 %v459, %v469
        %v543 = vmul.f32 %v459, %v473
        %v544 = vmul.f32 %v459, %v477
        %v545 = vmul.f32 %v459, %v481
        %v546 = vmul.f32 %v463, %v469
        %v547 = vmul.f32 %v463, %v473
        %v548 = vmul.f32 %v463, %v477
        %v549 = vmul.f32 %v463, %v481
        %v550 = vadd.f32 %v335, %v486
        %v551 = vadd.f32 %v336, %v487
        %v552 = vadd.f32 %v337, %v488
        %v553 = vadd.f32 %v338, %v489
        %v554 = vadd.f32 %v339, %v490
        %v555 = vadd.f32 %v340, %v491
        %v556 = vadd.f32 %v341, %v492
        %v557 = vadd.f32 %v342, %v493
        %v558 = vadd.f32 %v343, %v494
        %v559 = vadd.f32 %v344, %v495
        %v560 = vadd.f32 %v345, %v496
        %v561 = vadd.f32 %v346, %v497
        %v562 = vadd.f32 %v347, %v498
        %v563 = vadd.f32 %v348, %v499
        %v564 = vadd.f32 %v349, %v500
        %v565 = vadd.f32 %v350, %v501
        %v566 = vadd.f32 %v351, %v502
        %v567 = vadd.f32 %v352, %v503
        %v568 = vadd.f32 %v353, %v504
        %v569 = vadd.f32 %v354, %v505
        %v570 = vadd.f32 %v355, %v506
        %v571 = vadd.f32 %v356, %v507
        %v572 = vadd.f32 %v357, %v508
        %v573 = vadd.f32 %v358, %v509
        %v574 = vadd.f32 %v359, %v510
        %v575 = vadd.f32 %v360, %v511
        %v576 = vadd.f32 %v361, %v512
        %v577 = vadd.f32 %v362, %v513
        %v578 = vadd.f32 %v363, %v514
        %v579 = vadd.f32 %v364, %v515
        %v580 = vadd.f32 %v365, %v516
        %v581 = vadd.f32 %v366, %v517
        %v582 = vadd.f32 %v367, %v518
        %v583 = vadd.f32 %v368, %v519
        %v584 = vadd.f32 %v369, %v520
        %v585 = vadd.f32 %v370, %v521
        %v586 = vadd.f32 %v371, %v522
        %v587 = vadd.f32 %v372, %v523
        %v588 = vadd.f32 %v373, %v524
        %v589 = vadd.f32 %v374, %v525
        %v590 = vadd.f32 %v375, %v526
        %v591 = vadd.f32 %v376, %v527
        %v592 = vadd.f32 %v377, %v528
        %v593 = vadd.f32 %v378, %v529
        %v594 = vadd.f32 %v379, %v530
        %v595 = vadd.f32 %v380, %v531
        %v596 = vadd.f32 %v381, %v532
        %v597 = vadd.f32 %v382, %v533
        %v598 = vadd.f32 %v383, %v534
        %v599 = vadd.f32 %v384, %v535
        %v600 = vadd.f32 %v385, %v536
        %v601 = vadd.f32 %v386, %v537
        %v602 = vadd.f32 %v387, %v538
        %v603 = vadd.f32 %v388, %v539
        %v604 = vadd.f32 %v389, %v540
        %v605 = vadd.f32 %v390, %v541
        %v606 = vadd.f32 %v391, %v542
        %v607 = vadd.f32 %v392, %v543
        %v608 = vadd.f32 %v393, %v544
        %v609 = vadd.f32 %v394, %v545
        %v610 = vadd.f32 %v395, %v546
        %v611 = vadd.f32 %v396, %v547
        %v612 = vadd.f32 %v397, %v548
        %v613 = vadd.f32 %v398, %v549
        %v614 = vpack.c.bf16 %v554, %v550
        %v615 = vpack.c.bf16 %v555, %v551
        %v616 = vpack.c.bf16 %v556, %v552
        %v617 = vpack.c.bf16 %v557, %v553
        %v618 = vpack.c.bf16 %v562, %v558
        %v619 = vpack.c.bf16 %v563, %v559
        %v620 = vpack.c.bf16 %v564, %v560
        %v621 = vpack.c.bf16 %v565, %v561
        %v622 = vpack.c.bf16 %v570, %v566
        %v623 = vpack.c.bf16 %v571, %v567
        %v624 = vpack.c.bf16 %v572, %v568
        %v625 = vpack.c.bf16 %v573, %v569
        %v626 = vpack.c.bf16 %v578, %v574
        %v627 = vpack.c.bf16 %v579, %v575
        %v628 = vpack.c.bf16 %v580, %v576
        %v629 = vpack.c.bf16 %v581, %v577
        %v630 = vpack.c.bf16 %v586, %v582
        %v631 = vpack.c.bf16 %v587, %v583
        %v632 = vpack.c.bf16 %v588, %v584
        %v633 = vpack.c.bf16 %v589, %v585
        %v634 = vpack.c.bf16 %v594, %v590
        %v635 = vpack.c.bf16 %v595, %v591
        %v636 = vpack.c.bf16 %v596, %v592
        %v637 = vpack.c.bf16 %v597, %v593
        %v638 = vpack.c.bf16 %v602, %v598
        %v639 = vpack.c.bf16 %v603, %v599
        %v640 = vpack.c.bf16 %v604, %v600
        %v641 = vpack.c.bf16 %v605, %v601
        %v642 = vpack.c.bf16 %v610, %v606
        %v643 = vpack.c.bf16 %v611, %v607
        %v644 = vpack.c.bf16 %v612, %v608
        %v645 = vpack.c.bf16 %v613, %v609
        %v646 = vtanh.bf16.pop %v614
        %v647 = vtanh.bf16.pop %v615
        %v648 = vtanh.bf16.pop %v616
        %v649 = vtanh.bf16.pop %v617
        %v650 = vtanh.bf16.pop %v618
        %v651 = vtanh.bf16.pop %v619
        %v652 = vtanh.bf16.pop %v620
        %v653 = vtanh.bf16.pop %v621
        %v654 = vtanh.bf16.pop %v622
        %v655 = vtanh.bf16.pop %v623
        %v656 = vtanh.bf16.pop %v624
        %v657 = vtanh.bf16.pop %v625
        %v658 = vtanh.bf16.pop %v626
        %v659 = vtanh.bf16.pop %v627
        %v660 = vtanh.bf16.pop %v628
        %v661 = vtanh.bf16.pop %v629
        %v662 = vtanh.bf16.pop %v630
        %v663 = vtanh.bf16.pop %v631
        %v664 = vtanh.bf16.pop %v632
        %v665 = vtanh.bf16.pop %v633
        %v666 = vtanh.bf16.pop %v634
        %v667 = vtanh.bf16.pop %v635
        %v668 = vtanh.bf16.pop %v636
        %v669 = vtanh.bf16.pop %v637
        %v670 = vtanh.bf16.pop %v638
        %v671 = vtanh.bf16.pop %v639
        %v672 = vtanh.bf16.pop %v640
        %v673 = vtanh.bf16.pop %v641
        %v674 = vtanh.bf16.pop %v642
        %v675 = vtanh.bf16.pop %v643
        %v676 = vtanh.bf16.pop %v644
        %v677 = vtanh.bf16.pop %v645
        %v678 = vld [vmem:[#allocation2] sm:$0xff]
        %v679 = vld [vmem:[#allocation2 + $0x8] sm:$0xff]
        %v680 = vld [vmem:[#allocation2 + $0x10] sm:$0xff]
        %v681 = vld [vmem:[#allocation2 + $0x18] sm:$0xff]
        %v682 = vld [vmem:[#allocation2 + $0x20] sm:$0xff]
        %v683 = vld [vmem:[#allocation2 + $0x28] sm:$0xff]
        %v684 = vld [vmem:[#allocation2 + $0x30] sm:$0xff]
        %v685 = vld [vmem:[#allocation2 + $0x38] sm:$0xff]
        %v686 = vld [vmem:[#allocation2 + $0x40] sm:$0xff]
        %v687 = vld [vmem:[#allocation2 + $0x48] sm:$0xff]
        %v688 = vld [vmem:[#allocation2 + $0x50] sm:$0xff]
        %v689 = vld [vmem:[#allocation2 + $0x58] sm:$0xff]
        %v690 = vld [vmem:[#allocation2 + $0x60] sm:$0xff]
        %v691 = vld [vmem:[#allocation2 + $0x68] sm:$0xff]
        %v692 = vld [vmem:[#allocation2 + $0x70] sm:$0xff]
        %v693 = vld [vmem:[#allocation2 + $0x78] sm:$0xff]
        %v694 = vld [vmem:[#allocation2 + $0x80] sm:$0xff]
        %v695 = vld [vmem:[#allocation2 + $0x88] sm:$0xff]
        %v696 = vld [vmem:[#allocation2 + $0x90] sm:$0xff]
        %v697 = vld [vmem:[#allocation2 + $0x98] sm:$0xff]
        %v698 = vld [vmem:[#allocation2 + $0xa0] sm:$0xff]
        %v699 = vld [vmem:[#allocation2 + $0xa8] sm:$0xff]
        %v700 = vld [vmem:[#allocation2 + $0xb0] sm:$0xff]
        %v701 = vld [vmem:[#allocation2 + $0xb8] sm:$0xff]
        %v702 = vld [vmem:[#allocation2 + $0xc0] sm:$0xff]
        %v703 = vld [vmem:[#allocation2 + $0xc8] sm:$0xff]
        %v704 = vld [vmem:[#allocation2 + $0xd0] sm:$0xff]
        %v705 = vld [vmem:[#allocation2 + $0xd8] sm:$0xff]
        %v706 = vld [vmem:[#allocation2 + $0xe0] sm:$0xff]
        %v707 = vld [vmem:[#allocation2 + $0xe8] sm:$0xff]
        %v708 = vld [vmem:[#allocation2 + $0xf0] sm:$0xff]
        %v709 = vld [vmem:[#allocation2 + $0xf8] sm:$0xff]
        %v710 = vld [vmem:[#allocation2 + $0x100] sm:$0xff]
        %v711 = vld [vmem:[#allocation2 + $0x108] sm:$0xff]
        %v712 = vld [vmem:[#allocation2 + $0x110] sm:$0xff]
        %v713 = vld [vmem:[#allocation2 + $0x118] sm:$0xff]
        %v714 = vld [vmem:[#allocation2 + $0x120] sm:$0xff]
        %v715 = vld [vmem:[#allocation2 + $0x128] sm:$0xff]
        %v716 = vld [vmem:[#allocation2 + $0x130] sm:$0xff]
        %v717 = vld [vmem:[#allocation2 + $0x138] sm:$0xff]
        %v718 = vld [vmem:[#allocation2 + $0x140] sm:$0xff]
        %v719 = vld [vmem:[#allocation2 + $0x148] sm:$0xff]
        %v720 = vld [vmem:[#allocation2 + $0x150] sm:$0xff]
        %v721 = vld [vmem:[#allocation2 + $0x158] sm:$0xff]
        %v722 = vld [vmem:[#allocation2 + $0x160] sm:$0xff]
        %v723 = vld [vmem:[#allocation2 + $0x168] sm:$0xff]
        %v724 = vld [vmem:[#allocation2 + $0x170] sm:$0xff]
        %v725 = vld [vmem:[#allocation2 + $0x178] sm:$0xff]
        %v726 = vld [vmem:[#allocation2 + $0x180] sm:$0xff]
        %v727 = vld [vmem:[#allocation2 + $0x188] sm:$0xff]
        %v728 = vld [vmem:[#allocation2 + $0x190] sm:$0xff]
        %v729 = vld [vmem:[#allocation2 + $0x198] sm:$0xff]
        %v730 = vld [vmem:[#allocation2 + $0x1a0] sm:$0xff]
        %v731 = vld [vmem:[#allocation2 + $0x1a8] sm:$0xff]
        %v732 = vld [vmem:[#allocation2 + $0x1b0] sm:$0xff]
        %v733 = vld [vmem:[#allocation2 + $0x1b8] sm:$0xff]
        %v734 = vld [vmem:[#allocation2 + $0x1c0] sm:$0xff]
        %v735 = vld [vmem:[#allocation2 + $0x1c8] sm:$0xff]
        %v736 = vld [vmem:[#allocation2 + $0x1d0] sm:$0xff]
        %v737 = vld [vmem:[#allocation2 + $0x1d8] sm:$0xff]
        %v738 = vld [vmem:[#allocation2 + $0x1e0] sm:$0xff]
        %v739 = vld [vmem:[#allocation2 + $0x1e8] sm:$0xff]
        %v740 = vld [vmem:[#allocation2 + $0x1f0] sm:$0xff]
        %v741 = vld [vmem:[#allocation2 + $0x1f8] sm:$0xff]
        %v742 = vld [vmem:[#allocation2 + $0x200] sm:$0xff]
        %v743 = vld [vmem:[#allocation2 + $0x208] sm:$0xff]
        %v744 = vld [vmem:[#allocation2 + $0x210] sm:$0xff]
        %v745 = vld [vmem:[#allocation2 + $0x218] sm:$0xff]
        %v746 = vld [vmem:[#allocation2 + $0x220] sm:$0xff]
        %v747 = vld [vmem:[#allocation2 + $0x228] sm:$0xff]
        %v748 = vld [vmem:[#allocation2 + $0x230] sm:$0xff]
        %v749 = vld [vmem:[#allocation2 + $0x238] sm:$0xff]
        %v750 = vld [vmem:[#allocation2 + $0x240] sm:$0xff]
        %v751 = vld [vmem:[#allocation2 + $0x248] sm:$0xff]
        %v752 = vld [vmem:[#allocation2 + $0x250] sm:$0xff]
        %v753 = vld [vmem:[#allocation2 + $0x258] sm:$0xff]
        %v754 = vld [vmem:[#allocation2 + $0x260] sm:$0xff]
        %v755 = vld [vmem:[#allocation2 + $0x268] sm:$0xff]
        %v756 = vld [vmem:[#allocation2 + $0x270] sm:$0xff]
        %v757 = vld [vmem:[#allocation2 + $0x278] sm:$0xff]
        %v758 = vld [vmem:[#allocation2 + $0x280] sm:$0xff]
        %v759 = vld [vmem:[#allocation2 + $0x288] sm:$0xff]
        %v760 = vld [vmem:[#allocation2 + $0x290] sm:$0xff]
        %v761 = vld [vmem:[#allocation2 + $0x298] sm:$0xff]
        %v762 = vld [vmem:[#allocation2 + $0x2a0] sm:$0xff]
        %v763 = vld [vmem:[#allocation2 + $0x2a8] sm:$0xff]
        %v764 = vld [vmem:[#allocation2 + $0x2b0] sm:$0xff]
        %v765 = vld [vmem:[#allocation2 + $0x2b8] sm:$0xff]
        %v766 = vld [vmem:[#allocation2 + $0x2c0] sm:$0xff]
        %v767 = vld [vmem:[#allocation2 + $0x2c8] sm:$0xff]
        %v768 = vld [vmem:[#allocation2 + $0x2d0] sm:$0xff]
        %v769 = vld [vmem:[#allocation2 + $0x2d8] sm:$0xff]
        %v770 = vld [vmem:[#allocation2 + $0x2e0] sm:$0xff]
        %v771 = vld [vmem:[#allocation2 + $0x2e8] sm:$0xff]
        %v772 = vld [vmem:[#allocation2 + $0x2f0] sm:$0xff]
        %v773 = vld [vmem:[#allocation2 + $0x2f8] sm:$0xff]
        %v774 = vld [vmem:[#allocation2 + $0x300] sm:$0xff]
        %v775 = vld [vmem:[#allocation2 + $0x308] sm:$0xff]
        %v776 = vld [vmem:[#allocation2 + $0x310] sm:$0xff]
        %v777 = vld [vmem:[#allocation2 + $0x318] sm:$0xff]
        %v778 = vld [vmem:[#allocation2 + $0x320] sm:$0xff]
        %v779 = vld [vmem:[#allocation2 + $0x328] sm:$0xff]
        %v780 = vld [vmem:[#allocation2 + $0x330] sm:$0xff]
        %v781 = vld [vmem:[#allocation2 + $0x338] sm:$0xff]
        %v782 = vld [vmem:[#allocation2 + $0x340] sm:$0xff]
        %v783 = vld [vmem:[#allocation2 + $0x348] sm:$0xff]
        %v784 = vld [vmem:[#allocation2 + $0x350] sm:$0xff]
        %v785 = vld [vmem:[#allocation2 + $0x358] sm:$0xff]
        %v786 = vld [vmem:[#allocation2 + $0x360] sm:$0xff]
        %v787 = vld [vmem:[#allocation2 + $0x368] sm:$0xff]
        %v788 = vld [vmem:[#allocation2 + $0x370] sm:$0xff]
        %v789 = vld [vmem:[#allocation2 + $0x378] sm:$0xff]
        %v790 = vld [vmem:[#allocation2 + $0x380] sm:$0xff]
        %v791 = vld [vmem:[#allocation2 + $0x388] sm:$0xff]
        %v792 = vld [vmem:[#allocation2 + $0x390] sm:$0xff]
        %v793 = vld [vmem:[#allocation2 + $0x398] sm:$0xff]
        %v794 = vld [vmem:[#allocation2 + $0x3a0] sm:$0xff]
        %v795 = vld [vmem:[#allocation2 + $0x3a8] sm:$0xff]
        %v796 = vld [vmem:[#allocation2 + $0x3b0] sm:$0xff]
        %v797 = vld [vmem:[#allocation2 + $0x3b8] sm:$0xff]
        %v798 = vld [vmem:[#allocation2 + $0x3c0] sm:$0xff]
        %v799 = vld [vmem:[#allocation2 + $0x3c8] sm:$0xff]
        %v800 = vld [vmem:[#allocation2 + $0x3d0] sm:$0xff]
        %v801 = vld [vmem:[#allocation2 + $0x3d8] sm:$0xff]
        %v802 = vld [vmem:[#allocation2 + $0x3e0] sm:$0xff]
        %v803 = vld [vmem:[#allocation2 + $0x3e8] sm:$0xff]
        %v804 = vld [vmem:[#allocation2 + $0x3f0] sm:$0xff]
        %v805 = vld [vmem:[#allocation2 + $0x3f8] sm:$0xff]
        %v934 = vunpack.c.l.b16 %v678
        %v935 = vunpack.c.h.b16 %v678
        %v936 = vunpack.c.l.b16 %v679
        %v937 = vunpack.c.h.b16 %v679
        %v938 = vunpack.c.l.b16 %v680
        %v939 = vunpack.c.h.b16 %v680
        %v940 = vunpack.c.l.b16 %v681
        %v941 = vunpack.c.h.b16 %v681
        %v942 = vunpack.c.l.b16 %v682
        %v943 = vunpack.c.h.b16 %v682
        %v944 = vunpack.c.l.b16 %v683
        %v945 = vunpack.c.h.b16 %v683
        %v946 = vunpack.c.l.b16 %v684
        %v947 = vunpack.c.h.b16 %v684
        %v948 = vunpack.c.l.b16 %v685
        %v949 = vunpack.c.h.b16 %v685
        %v950 = vunpack.c.l.b16 %v686
        %v951 = vunpack.c.h.b16 %v686
        %v952 = vunpack.c.l.b16 %v687
        %v953 = vunpack.c.h.b16 %v687
        %v954 = vunpack.c.l.b16 %v688
        %v955 = vunpack.c.h.b16 %v688
        %v956 = vunpack.c.l.b16 %v689
        %v957 = vunpack.c.h.b16 %v689
        %v958 = vunpack.c.l.b16 %v690
        %v959 = vunpack.c.h.b16 %v690
        %v960 = vunpack.c.l.b16 %v691
        %v961 = vunpack.c.h.b16 %v691
        %v962 = vunpack.c.l.b16 %v692
        %v963 = vunpack.c.h.b16 %v692
        %v964 = vunpack.c.l.b16 %v693
        %v965 = vunpack.c.h.b16 %v693
        %v966 = vunpack.c.l.b16 %v694
        %v967 = vunpack.c.h.b16 %v694
        %v968 = vunpack.c.l.b16 %v695
        %v969 = vunpack.c.h.b16 %v695
        %v970 = vunpack.c.l.b16 %v696
        %v971 = vunpack.c.h.b16 %v696
        %v972 = vunpack.c.l.b16 %v697
        %v973 = vunpack.c.h.b16 %v697
        %v974 = vunpack.c.l.b16 %v698
        %v975 = vunpack.c.h.b16 %v698
        %v976 = vunpack.c.l.b16 %v699
        %v977 = vunpack.c.h.b16 %v699
        %v978 = vunpack.c.l.b16 %v700
        %v979 = vunpack.c.h.b16 %v700
        %v980 = vunpack.c.l.b16 %v701
        %v981 = vunpack.c.h.b16 %v701
        %v982 = vunpack.c.l.b16 %v702
        %v983 = vunpack.c.h.b16 %v702
        %v984 = vunpack.c.l.b16 %v703
        %v985 = vunpack.c.h.b16 %v703
        %v986 = vunpack.c.l.b16 %v704
        %v987 = vunpack.c.h.b16 %v704
        %v988 = vunpack.c.l.b16 %v705
        %v989 = vunpack.c.h.b16 %v705
        %v990 = vunpack.c.l.b16 %v706
        %v991 = vunpack.c.h.b16 %v706
        %v992 = vunpack.c.l.b16 %v707
        %v993 = vunpack.c.h.b16 %v707
        %v994 = vunpack.c.l.b16 %v708
        %v995 = vunpack.c.h.b16 %v708
        %v996 = vunpack.c.l.b16 %v709
        %v997 = vunpack.c.h.b16 %v709
        %v998 = vunpack.c.l.b16 %v710
        %v999 = vunpack.c.h.b16 %v710
        %v1000 = vunpack.c.l.b16 %v711
        %v1001 = vunpack.c.h.b16 %v711
        %v1002 = vunpack.c.l.b16 %v712
        %v1003 = vunpack.c.h.b16 %v712
        %v1004 = vunpack.c.l.b16 %v713
        %v1005 = vunpack.c.h.b16 %v713
        %v1006 = vunpack.c.l.b16 %v714
        %v1007 = vunpack.c.h.b16 %v714
        %v1008 = vunpack.c.l.b16 %v715
        %v1009 = vunpack.c.h.b16 %v715
        %v1010 = vunpack.c.l.b16 %v716
        %v1011 = vunpack.c.h.b16 %v716
        %v1012 = vunpack.c.l.b16 %v717
        %v1013 = vunpack.c.h.b16 %v717
        %v1014 = vunpack.c.l.b16 %v718
        %v1015 = vunpack.c.h.b16 %v718
        %v1016 = vunpack.c.l.b16 %v719
        %v1017 = vunpack.c.h.b16 %v719
        %v1018 = vunpack.c.l.b16 %v720
        %v1019 = vunpack.c.h.b16 %v720
        %v1020 = vunpack.c.l.b16 %v721
        %v1021 = vunpack.c.h.b16 %v721
        %v1022 = vunpack.c.l.b16 %v722
        %v1023 = vunpack.c.h.b16 %v722
        %v1024 = vunpack.c.l.b16 %v723
        %v1025 = vunpack.c.h.b16 %v723
        %v1026 = vunpack.c.l.b16 %v724
        %v1027 = vunpack.c.h.b16 %v724
        %v1028 = vunpack.c.l.b16 %v725
        %v1029 = vunpack.c.h.b16 %v725
        %v1030 = vunpack.c.l.b16 %v726
        %v1031 = vunpack.c.h.b16 %v726
        %v1032 = vunpack.c.l.b16 %v727
        %v1033 = vunpack.c.h.b16 %v727
        %v1034 = vunpack.c.l.b16 %v728
        %v1035 = vunpack.c.h.b16 %v728
        %v1036 = vunpack.c.l.b16 %v729
        %v1037 = vunpack.c.h.b16 %v729
        %v1038 = vunpack.c.l.b16 %v730
        %v1039 = vunpack.c.h.b16 %v730
        %v1040 = vunpack.c.l.b16 %v731
        %v1041 = vunpack.c.h.b16 %v731
        %v1042 = vunpack.c.l.b16 %v732
        %v1043 = vunpack.c.h.b16 %v732
        %v1044 = vunpack.c.l.b16 %v733
        %v1045 = vunpack.c.h.b16 %v733
        %v1046 = vunpack.c.l.b16 %v734
        %v1047 = vunpack.c.h.b16 %v734
        %v1048 = vunpack.c.l.b16 %v735
        %v1049 = vunpack.c.h.b16 %v735
        %v1050 = vunpack.c.l.b16 %v736
        %v1051 = vunpack.c.h.b16 %v736
        %v1052 = vunpack.c.l.b16 %v737
        %v1053 = vunpack.c.h.b16 %v737
        %v1054 = vunpack.c.l.b16 %v738
        %v1055 = vunpack.c.h.b16 %v738
        %v1056 = vunpack.c.l.b16 %v739
        %v1057 = vunpack.c.h.b16 %v739
        %v1058 = vunpack.c.l.b16 %v740
        %v1059 = vunpack.c.h.b16 %v740
        %v1060 = vunpack.c.l.b16 %v741
        %v1061 = vunpack.c.h.b16 %v741
        %v1062 = vunpack.c.l.b16 %v742
        %v1063 = vunpack.c.h.b16 %v742
        %v1064 = vunpack.c.l.b16 %v743
        %v1065 = vunpack.c.h.b16 %v743
        %v1066 = vunpack.c.l.b16 %v744
        %v1067 = vunpack.c.h.b16 %v744
        %v1068 = vunpack.c.l.b16 %v745
        %v1069 = vunpack.c.h.b16 %v745
        %v1070 = vunpack.c.l.b16 %v746
        %v1071 = vunpack.c.h.b16 %v746
        %v1072 = vunpack.c.l.b16 %v747
        %v1073 = vunpack.c.h.b16 %v747
        %v1074 = vunpack.c.l.b16 %v748
        %v1075 = vunpack.c.h.b16 %v748
        %v1076 = vunpack.c.l.b16 %v749
        %v1077 = vunpack.c.h.b16 %v749
        %v1078 = vunpack.c.l.b16 %v750
        %v1079 = vunpack.c.h.b16 %v750
        %v1080 = vunpack.c.l.b16 %v751
        %v1081 = vunpack.c.h.b16 %v751
        %v1082 = vunpack.c.l.b16 %v752
        %v1083 = vunpack.c.h.b16 %v752
        %v1084 = vunpack.c.l.b16 %v753
        %v1085 = vunpack.c.h.b16 %v753
        %v1086 = vunpack.c.l.b16 %v754
        %v1087 = vunpack.c.h.b16 %v754
        %v1088 = vunpack.c.l.b16 %v755
        %v1089 = vunpack.c.h.b16 %v755
        %v1090 = vunpack.c.l.b16 %v756
        %v1091 = vunpack.c.h.b16 %v756
        %v1092 = vunpack.c.l.b16 %v757
        %v1093 = vunpack.c.h.b16 %v757
        %v1094 = vunpack.c.l.b16 %v758
        %v1095 = vunpack.c.h.b16 %v758
        %v1096 = vunpack.c.l.b16 %v759
        %v1097 = vunpack.c.h.b16 %v759
        %v1098 = vunpack.c.l.b16 %v760
        %v1099 = vunpack.c.h.b16 %v760
        %v1100 = vunpack.c.l.b16 %v761
        %v1101 = vunpack.c.h.b16 %v761
        %v1102 = vunpack.c.l.b16 %v762
        %v1103 = vunpack.c.h.b16 %v762
        %v1104 = vunpack.c.l.b16 %v763
        %v1105 = vunpack.c.h.b16 %v763
        %v1106 = vunpack.c.l.b16 %v764
        %v1107 = vunpack.c.h.b16 %v764
        %v1108 = vunpack.c.l.b16 %v765
        %v1109 = vunpack.c.h.b16 %v765
        %v1110 = vunpack.c.l.b16 %v766
        %v1111 = vunpack.c.h.b16 %v766
        %v1112 = vunpack.c.l.b16 %v767
        %v1113 = vunpack.c.h.b16 %v767
        %v1114 = vunpack.c.l.b16 %v768
        %v1115 = vunpack.c.h.b16 %v768
        %v1116 = vunpack.c.l.b16 %v769
        %v1117 = vunpack.c.h.b16 %v769
        %v1118 = vunpack.c.l.b16 %v770
        %v1119 = vunpack.c.h.b16 %v770
        %v1120 = vunpack.c.l.b16 %v771
        %v1121 = vunpack.c.h.b16 %v771
        %v1122 = vunpack.c.l.b16 %v772
        %v1123 = vunpack.c.h.b16 %v772
        %v1124 = vunpack.c.l.b16 %v773
        %v1125 = vunpack.c.h.b16 %v773
        %v1126 = vunpack.c.l.b16 %v774
        %v1127 = vunpack.c.h.b16 %v774
        %v1128 = vunpack.c.l.b16 %v775
        %v1129 = vunpack.c.h.b16 %v775
        %v1130 = vunpack.c.l.b16 %v776
        %v1131 = vunpack.c.h.b16 %v776
        %v1132 = vunpack.c.l.b16 %v777
        %v1133 = vunpack.c.h.b16 %v777
        %v1134 = vunpack.c.l.b16 %v778
        %v1135 = vunpack.c.h.b16 %v778
        %v1136 = vunpack.c.l.b16 %v779
        %v1137 = vunpack.c.h.b16 %v779
        %v1138 = vunpack.c.l.b16 %v780
        %v1139 = vunpack.c.h.b16 %v780
        %v1140 = vunpack.c.l.b16 %v781
        %v1141 = vunpack.c.h.b16 %v781
        %v1142 = vunpack.c.l.b16 %v782
        %v1143 = vunpack.c.h.b16 %v782
        %v1144 = vunpack.c.l.b16 %v783
        %v1145 = vunpack.c.h.b16 %v783
        %v1146 = vunpack.c.l.b16 %v784
        %v1147 = vunpack.c.h.b16 %v784
        %v1148 = vunpack.c.l.b16 %v785
        %v1149 = vunpack.c.h.b16 %v785
        %v1150 = vunpack.c.l.b16 %v786
        %v1151 = vunpack.c.h.b16 %v786
        %v1152 = vunpack.c.l.b16 %v787
        %v1153 = vunpack.c.h.b16 %v787
        %v1154 = vunpack.c.l.b16 %v788
        %v1155 = vunpack.c.h.b16 %v788
        %v1156 = vunpack.c.l.b16 %v789
        %v1157 = vunpack.c.h.b16 %v789
        %v1158 = vunpack.c.l.b16 %v790
        %v1159 = vunpack.c.h.b16 %v790
        %v1160 = vunpack.c.l.b16 %v791
        %v1161 = vunpack.c.h.b16 %v791
        %v1162 = vunpack.c.l.b16 %v792
        %v1163 = vunpack.c.h.b16 %v792
        %v1164 = vunpack.c.l.b16 %v793
        %v1165 = vunpack.c.h.b16 %v793
        %v1166 = vunpack.c.l.b16 %v794
        %v1167 = vunpack.c.h.b16 %v794
        %v1168 = vunpack.c.l.b16 %v795
        %v1169 = vunpack.c.h.b16 %v795
        %v1170 = vunpack.c.l.b16 %v796
        %v1171 = vunpack.c.h.b16 %v796
        %v1172 = vunpack.c.l.b16 %v797
        %v1173 = vunpack.c.h.b16 %v797
        %v1174 = vunpack.c.l.b16 %v798
        %v1175 = vunpack.c.h.b16 %v798
        %v1176 = vunpack.c.l.b16 %v799
        %v1177 = vunpack.c.h.b16 %v799
        %v1178 = vunpack.c.l.b16 %v800
        %v1179 = vunpack.c.h.b16 %v800
        %v1180 = vunpack.c.l.b16 %v801
        %v1181 = vunpack.c.h.b16 %v801
        %v1182 = vunpack.c.l.b16 %v802
        %v1183 = vunpack.c.h.b16 %v802
        %v1184 = vunpack.c.l.b16 %v803
        %v1185 = vunpack.c.h.b16 %v803
        %v1186 = vunpack.c.l.b16 %v804
        %v1187 = vunpack.c.h.b16 %v804
        %v1188 = vunpack.c.l.b16 %v805
        %v1189 = vunpack.c.h.b16 %v805
        %v1190 = vpack.c.b16 %v938, %v934
        %v1191 = vpack.c.b16 %v939, %v935
        %v1192 = vpack.c.b16 %v940, %v936
        %v1193 = vpack.c.b16 %v941, %v937
        %v1194 = vpack.c.b16 %v946, %v942
        %v1195 = vpack.c.b16 %v947, %v943
        %v1196 = vpack.c.b16 %v948, %v944
        %v1197 = vpack.c.b16 %v949, %v945
        %v1198 = vpack.c.b16 %v954, %v950
        %v1199 = vpack.c.b16 %v955, %v951
        %v1200 = vpack.c.b16 %v956, %v952
        %v1201 = vpack.c.b16 %v957, %v953
        %v1202 = vpack.c.b16 %v962, %v958
        %v1203 = vpack.c.b16 %v963, %v959
        %v1204 = vpack.c.b16 %v964, %v960
        %v1205 = vpack.c.b16 %v965, %v961
        %v1206 = vpack.c.b16 %v970, %v966
        %v1207 = vpack.c.b16 %v971, %v967
        %v1208 = vpack.c.b16 %v972, %v968
        %v1209 = vpack.c.b16 %v973, %v969
        %v1210 = vpack.c.b16 %v978, %v974
        %v1211 = vpack.c.b16 %v979, %v975
        %v1212 = vpack.c.b16 %v980, %v976
        %v1213 = vpack.c.b16 %v981, %v977
        %v1214 = vpack.c.b16 %v986, %v982
        %v1215 = vpack.c.b16 %v987, %v983
        %v1216 = vpack.c.b16 %v988, %v984
        %v1217 = vpack.c.b16 %v989, %v985
        %v1218 = vpack.c.b16 %v994, %v990
        %v1219 = vpack.c.b16 %v995, %v991
        %v1220 = vpack.c.b16 %v996, %v992
        %v1221 = vpack.c.b16 %v997, %v993
        %v1222 = vpack.c.b16 %v1002, %v998
        %v1223 = vpack.c.b16 %v1003, %v999
        %v1224 = vpack.c.b16 %v1004, %v1000
        %v1225 = vpack.c.b16 %v1005, %v1001
        %v1226 = vpack.c.b16 %v1010, %v1006
        %v1227 = vpack.c.b16 %v1011, %v1007
        %v1228 = vpack.c.b16 %v1012, %v1008
        %v1229 = vpack.c.b16 %v1013, %v1009
        %v1230 = vpack.c.b16 %v1018, %v1014
        %v1231 = vpack.c.b16 %v1019, %v1015
        %v1232 = vpack.c.b16 %v1020, %v1016
        %v1233 = vpack.c.b16 %v1021, %v1017
        %v1234 = vpack.c.b16 %v1026, %v1022
        %v1235 = vpack.c.b16 %v1027, %v1023
        %v1236 = vpack.c.b16 %v1028, %v1024
        %v1237 = vpack.c.b16 %v1029, %v1025
        %v1238 = vpack.c.b16 %v1034, %v1030
        %v1239 = vpack.c.b16 %v1035, %v1031
        %v1240 = vpack.c.b16 %v1036, %v1032
        %v1241 = vpack.c.b16 %v1037, %v1033
        %v1242 = vpack.c.b16 %v1042, %v1038
        %v1243 = vpack.c.b16 %v1043, %v1039
        %v1244 = vpack.c.b16 %v1044, %v1040
        %v1245 = vpack.c.b16 %v1045, %v1041
        %v1246 = vpack.c.b16 %v1050, %v1046
        %v1247 = vpack.c.b16 %v1051, %v1047
        %v1248 = vpack.c.b16 %v1052, %v1048
        %v1249 = vpack.c.b16 %v1053, %v1049
        %v1250 = vpack.c.b16 %v1058, %v1054
        %v1251 = vpack.c.b16 %v1059, %v1055
        %v1252 = vpack.c.b16 %v1060, %v1056
        %v1253 = vpack.c.b16 %v1061, %v1057
        %v1254 = vpack.c.b16 %v1066, %v1062
        %v1255 = vpack.c.b16 %v1067, %v1063
        %v1256 = vpack.c.b16 %v1068, %v1064
        %v1257 = vpack.c.b16 %v1069, %v1065
        %v1258 = vpack.c.b16 %v1074, %v1070
        %v1259 = vpack.c.b16 %v1075, %v1071
        %v1260 = vpack.c.b16 %v1076, %v1072
        %v1261 = vpack.c.b16 %v1077, %v1073
        %v1262 = vpack.c.b16 %v1082, %v1078
        %v1263 = vpack.c.b16 %v1083, %v1079
        %v1264 = vpack.c.b16 %v1084, %v1080
        %v1265 = vpack.c.b16 %v1085, %v1081
        %v1266 = vpack.c.b16 %v1090, %v1086
        %v1267 = vpack.c.b16 %v1091, %v1087
        %v1268 = vpack.c.b16 %v1092, %v1088
        %v1269 = vpack.c.b16 %v1093, %v1089
        %v1270 = vpack.c.b16 %v1098, %v1094
        %v1271 = vpack.c.b16 %v1099, %v1095
        %v1272 = vpack.c.b16 %v1100, %v1096
        %v1273 = vpack.c.b16 %v1101, %v1097
        %v1274 = vpack.c.b16 %v1106, %v1102
        %v1275 = vpack.c.b16 %v1107, %v1103
        %v1276 = vpack.c.b16 %v1108, %v1104
        %v1277 = vpack.c.b16 %v1109, %v1105
        %v1278 = vpack.c.b16 %v1114, %v1110
        %v1279 = vpack.c.b16 %v1115, %v1111
        %v1280 = vpack.c.b16 %v1116, %v1112
        %v1281 = vpack.c.b16 %v1117, %v1113
        %v1282 = vpack.c.b16 %v1122, %v1118
        %v1283 = vpack.c.b16 %v1123, %v1119
        %v1284 = vpack.c.b16 %v1124, %v1120
        %v1285 = vpack.c.b16 %v1125, %v1121
        %v1286 = vpack.c.b16 %v1130, %v1126
        %v1287 = vpack.c.b16 %v1131, %v1127
        %v1288 = vpack.c.b16 %v1132, %v1128
        %v1289 = vpack.c.b16 %v1133, %v1129
        %v1290 = vpack.c.b16 %v1138, %v1134
        %v1291 = vpack.c.b16 %v1139, %v1135
        %v1292 = vpack.c.b16 %v1140, %v1136
        %v1293 = vpack.c.b16 %v1141, %v1137
        %v1294 = vpack.c.b16 %v1146, %v1142
        %v1295 = vpack.c.b16 %v1147, %v1143
        %v1296 = vpack.c.b16 %v1148, %v1144
        %v1297 = vpack.c.b16 %v1149, %v1145
        %v1298 = vpack.c.b16 %v1154, %v1150
        %v1299 = vpack.c.b16 %v1155, %v1151
        %v1300 = vpack.c.b16 %v1156, %v1152
        %v1301 = vpack.c.b16 %v1157, %v1153
        %v1302 = vpack.c.b16 %v1162, %v1158
        %v1303 = vpack.c.b16 %v1163, %v1159
        %v1304 = vpack.c.b16 %v1164, %v1160
        %v1305 = vpack.c.b16 %v1165, %v1161
        %v1306 = vpack.c.b16 %v1170, %v1166
        %v1307 = vpack.c.b16 %v1171, %v1167
        %v1308 = vpack.c.b16 %v1172, %v1168
        %v1309 = vpack.c.b16 %v1173, %v1169
        %v1310 = vpack.c.b16 %v1178, %v1174
        %v1311 = vpack.c.b16 %v1179, %v1175
        %v1312 = vpack.c.b16 %v1180, %v1176
        %v1313 = vpack.c.b16 %v1181, %v1177
        %v1314 = vpack.c.b16 %v1186, %v1182
        %v1315 = vpack.c.b16 %v1187, %v1183
        %v1316 = vpack.c.b16 %v1188, %v1184
        %v1317 = vpack.c.b16 %v1189, %v1185
        %1446 = vmatprep.subr.bf16.mxu0 %v1191
        %1447 = vmatpush1.bf16.msra.mxu0 %v1190
        %1448 = vmatprep.subr.bf16.mxu0 %v1195
        %1449 = vmatpush1.bf16.msra.mxu0 %v1194
        %1450 = vmatprep.subr.bf16.mxu0 %v1199
        %1451 = vmatpush1.bf16.msra.mxu0 %v1198
        %1452 = vmatprep.subr.bf16.mxu0 %v1203
        %1453 = vmatpush1.bf16.msra.mxu0 %v1202
        %1454 = vmatprep.subr.bf16.mxu0 %v1207
        %1455 = vmatpush1.bf16.msra.mxu0 %v1206
        %1456 = vmatprep.subr.bf16.mxu0 %v1211
        %1457 = vmatpush1.bf16.msra.mxu0 %v1210
        %1458 = vmatprep.subr.bf16.mxu0 %v1215
        %1459 = vmatpush1.bf16.msra.mxu0 %v1214
        %1460 = vmatprep.subr.bf16.mxu0 %v1219
        %1461 = vmatpush1.bf16.msra.mxu0 %v1218
        %1462 = vmatprep.subr.bf16.mxu0 %v1223
        %1463 = vmatpush1.bf16.msra.mxu0 %v1222
        %1464 = vmatprep.subr.bf16.mxu0 %v1227
        %1465 = vmatpush1.bf16.msra.mxu0 %v1226
        %1466 = vmatprep.subr.bf16.mxu0 %v1231
        %1467 = vmatpush1.bf16.msra.mxu0 %v1230
        %1468 = vmatprep.subr.bf16.mxu0 %v1235
        %1469 = vmatpush1.bf16.msra.mxu0 %v1234
        %1470 = vmatprep.subr.bf16.mxu0 %v1239
        %1471 = vmatpush1.bf16.msra.mxu0 %v1238
        %1472 = vmatprep.subr.bf16.mxu0 %v1243
        %1473 = vmatpush1.bf16.msra.mxu0 %v1242
        %1474 = vmatprep.subr.bf16.mxu0 %v1247
        %1475 = vmatpush1.bf16.msra.mxu0 %v1246
        %1476 = vmatprep.subr.bf16.mxu0 %v1251
        %1477 = vmatpush1.bf16.msra.mxu0 %v1250
        %1478 = vmatprep.mubr.bf16.mxu0 %v647
        %1479 = vmatmul.mubr.bf16.gmra.mrb[0].mxu0 %v646
        %v1480 = vpop.f32.mrb[0].mxu0
        %v1481 = vadd.f32 0.0, %v1480
        %v1482 = vpop.f32.mrb[0].mxu0
        %v1483 = vadd.f32 0.0, %v1482
        %v1484 = vpop.f32.mrb[0].mxu0
        %v1485 = vadd.f32 0.0, %v1484
        %v1486 = vpop.f32.mrb[0].mxu0
        %v1487 = vadd.f32 0.0, %v1486
        %1488 = vmatprep.mubr.bf16.mxu0 %v651
        %1489 = vmatmul.mubr.bf16.gmra.mrb[0].mxu0 %v650
        %v1490 = vpop.f32.mrb[0].mxu0
        %v1491 = vadd.f32 0.0, %v1490
        %v1492 = vpop.f32.mrb[0].mxu0
        %v1493 = vadd.f32 0.0, %v1492
        %v1494 = vpop.f32.mrb[0].mxu0
        %v1495 = vadd.f32 0.0, %v1494
        %v1496 = vpop.f32.mrb[0].mxu0
        %v1497 = vadd.f32 0.0, %v1496
        %1498 = vmatprep.mubr.bf16.mxu0 %v655
        %1499 = vmatmul.mubr.bf16.gmra.mrb[0].mxu0 %v654
        %v1500 = vpop.f32.mrb[0].mxu0
        %v1501 = vadd.f32 0.0, %v1500
        %v1502 = vpop.f32.mrb[0].mxu0
        %v1503 = vadd.f32 0.0, %v1502
        %v1504 = vpop.f32.mrb[0].mxu0
        %v1505 = vadd.f32 0.0, %v1504
        %v1506 = vpop.f32.mrb[0].mxu0
        %v1507 = vadd.f32 0.0, %v1506
        %1508 = vmatprep.mubr.bf16.mxu0 %v659
        %1509 = vmatmul.mubr.bf16.gmra.mrb[0].mxu0 %v658
        %v1510 = vpop.f32.mrb[0].mxu0
        %v1511 = vadd.f32 0.0, %v1510
        %v1512 = vpop.f32.mrb[0].mxu0
        %v1513 = vadd.f32 0.0, %v1512
        %v1514 = vpop.f32.mrb[0].mxu0
        %v1515 = vadd.f32 0.0, %v1514
        %v1516 = vpop.f32.mrb[0].mxu0
        %v1517 = vadd.f32 0.0, %v1516
        %1518 = vmatprep.mubr.bf16.mxu0 %v663
        %1519 = vmatmul.mubr.bf16.gmra.mrb[0].mxu0 %v662
        %v1520 = vpop.f32.mrb[0].mxu0
        %v1521 = vadd.f32 0.0, %v1520
        %v1522 = vpop.f32.mrb[0].mxu0
        %v1523 = vadd.f32 0.0, %v1522
        %v1524 = vpop.f32.mrb[0].mxu0
        %v1525 = vadd.f32 0.0, %v1524
        %v1526 = vpop.f32.mrb[0].mxu0
        %v1527 = vadd.f32 0.0, %v1526
        %1528 = vmatprep.mubr.bf16.mxu0 %v667
        %1529 = vmatmul.mubr.bf16.gmra.mrb[0].mxu0 %v666
        %v1530 = vpop.f32.mrb[0].mxu0
        %v1531 = vadd.f32 0.0, %v1530
        %v1532 = vpop.f32.mrb[0].mxu0
        %v1533 = vadd.f32 0.0, %v1532
        %v1534 = vpop.f32.mrb[0].mxu0
        %v1535 = vadd.f32 0.0, %v1534
        %v1536 = vpop.f32.mrb[0].mxu0
        %v1537 = vadd.f32 0.0, %v1536
        %1538 = vmatprep.mubr.bf16.mxu0 %v671
        %1539 = vmatmul.mubr.bf16.gmra.mrb[0].mxu0 %v670
        %v1540 = vpop.f32.mrb[0].mxu0
        %v1541 = vadd.f32 0.0, %v1540
        %v1542 = vpop.f32.mrb[0].mxu0
        %v1543 = vadd.f32 0.0, %v1542
        %v1544 = vpop.f32.mrb[0].mxu0
        %v1545 = vadd.f32 0.0, %v1544
        %v1546 = vpop.f32.mrb[0].mxu0
        %v1547 = vadd.f32 0.0, %v1546
        %1548 = vmatprep.mubr.bf16.mxu0 %v675
        %1549 = vmatmul.mubr.bf16.gmra.mrb[0].mxu0 %v674
        %v1550 = vpop.f32.mrb[0].mxu0
        %v1551 = vadd.f32 0.0, %v1550
        %v1552 = vpop.f32.mrb[0].mxu0
        %v1553 = vadd.f32 0.0, %v1552
        %v1554 = vpop.f32.mrb[0].mxu0
        %v1555 = vadd.f32 0.0, %v1554
        %v1556 = vpop.f32.mrb[0].mxu0
        %v1557 = vadd.f32 0.0, %v1556
        %1558 = vdwg.mxu0
        %1559 = vmatprep.subr.bf16.mxu0 %v1255
        %1560 = vmatpush1.bf16.msra.mxu0 %v1254
        %1561 = vmatprep.subr.bf16.mxu0 %v1259
        %1562 = vmatpush1.bf16.msra.mxu0 %v1258
        %1563 = vmatprep.subr.bf16.mxu0 %v1263
        %1564 = vmatpush1.bf16.msra.mxu0 %v1262
        %1565 = vmatprep.subr.bf16.mxu0 %v1267
        %1566 = vmatpush1.bf16.msra.mxu0 %v1266
        %1567 = vmatprep.subr.bf16.mxu0 %v1271
        %1568 = vmatpush1.bf16.msra.mxu0 %v1270
        %1569 = vmatprep.subr.bf16.mxu0 %v1275
        %1570 = vmatpush1.bf16.msra.mxu0 %v1274
        %1571 = vmatprep.subr.bf16.mxu0 %v1279
        %1572 = vmatpush1.bf16.msra.mxu0 %v1278
        %1573 = vmatprep.subr.bf16.mxu0 %v1283
        %1574 = vmatpush1.bf16.msra.mxu0 %v1282
        %1575 = vmatprep.subr.bf16.mxu0 %v1287
        %1576 = vmatpush1.bf16.msra.mxu0 %v1286
        %1577 = vmatprep.subr.bf16.mxu0 %v1291
        %1578 = vmatpush1.bf16.msra.mxu0 %v1290
        %1579 = vmatprep.subr.bf16.mxu0 %v1295
        %1580 = vmatpush1.bf16.msra.mxu0 %v1294
        %1581 = vmatprep.subr.bf16.mxu0 %v1299
        %1582 = vmatpush1.bf16.msra.mxu0 %v1298
        %1583 = vmatprep.subr.bf16.mxu0 %v1303
        %1584 = vmatpush1.bf16.msra.mxu0 %v1302
        %1585 = vmatprep.subr.bf16.mxu0 %v1307
        %1586 = vmatpush1.bf16.msra.mxu0 %v1306
        %1587 = vmatprep.subr.bf16.mxu0 %v1311
        %1588 = vmatpush1.bf16.msra.mxu0 %v1310
        %1589 = vmatprep.subr.bf16.mxu0 %v1315
        %1590 = vmatpush1.bf16.msra.mxu0 %v1314
        %1591 = vmatprep.mubr.bf16.mxu0 %v649
        %1592 = vmatmul.mubr.bf16.gmra.mrb[0].mxu0 %v648
        %v1593 = vpop.f32.mrb[0].mxu0
        %v1594 = vadd.f32 %v1481, %v1593
        %v1595 = vpop.f32.mrb[0].mxu0
        %v1596 = vadd.f32 %v1483, %v1595
        %v1597 = vpop.f32.mrb[0].mxu0
        %v1598 = vadd.f32 %v1485, %v1597
        %v1599 = vpop.f32.mrb[0].mxu0
        %v1600 = vadd.f32 %v1487, %v1599
        %1601 = vmatprep.mubr.bf16.mxu0 %v653
        %1602 = vmatmul.mubr.bf16.gmra.mrb[0].mxu0 %v652
        %v1603 = vpop.f32.mrb[0].mxu0
        %v1604 = vadd.f32 %v1491, %v1603
        %v1605 = vpop.f32.mrb[0].mxu0
        %v1606 = vadd.f32 %v1493, %v1605
        %v1607 = vpop.f32.mrb[0].mxu0
        %v1608 = vadd.f32 %v1495, %v1607
        %v1609 = vpop.f32.mrb[0].mxu0
        %v1610 = vadd.f32 %v1497, %v1609
        %1611 = vmatprep.mubr.bf16.mxu0 %v657
        %1612 = vmatmul.mubr.bf16.gmra.mrb[0].mxu0 %v656
        %v1613 = vpop.f32.mrb[0].mxu0
        %v1614 = vadd.f32 %v1501, %v1613
        %v1615 = vpop.f32.mrb[0].mxu0
        %v1616 = vadd.f32 %v1503, %v1615
        %v1617 = vpop.f32.mrb[0].mxu0
        %v1618 = vadd.f32 %v1505, %v1617
        %v1619 = vpop.f32.mrb[0].mxu0
        %v1620 = vadd.f32 %v1507, %v1619
        %1621 = vmatprep.mubr.bf16.mxu0 %v661
        %1622 = vmatmul.mubr.bf16.gmra.mrb[0].mxu0 %v660
        %v1623 = vpop.f32.mrb[0].mxu0
        %v1624 = vadd.f32 %v1511, %v1623
        %v1625 = vpop.f32.mrb[0].mxu0
        %v1626 = vadd.f32 %v1513, %v1625
        %v1627 = vpop.f32.mrb[0].mxu0
        %v1628 = vadd.f32 %v1515, %v1627
        %v1629 = vpop.f32.mrb[0].mxu0
        %v1630 = vadd.f32 %v1517, %v1629
        %1631 = vmatprep.mubr.bf16.mxu0 %v665
        %1632 = vmatmul.mubr.bf16.gmra.mrb[0].mxu0 %v664
        %v1633 = vpop.f32.mrb[0].mxu0
        %v1634 = vadd.f32 %v1521, %v1633
        %v1635 = vpop.f32.mrb[0].mxu0
        %v1636 = vadd.f32 %v1523, %v1635
        %v1637 = vpop.f32.mrb[0].mxu0
        %v1638 = vadd.f32 %v1525, %v1637
        %v1639 = vpop.f32.mrb[0].mxu0
        %v1640 = vadd.f32 %v1527, %v1639
        %1641 = vmatprep.mubr.bf16.mxu0 %v669
        %1642 = vmatmul.mubr.bf16.gmra.mrb[0].mxu0 %v668
        %v1643 = vpop.f32.mrb[0].mxu0
        %v1644 = vadd.f32 %v1531, %v1643
        %v1645 = vpop.f32.mrb[0].mxu0
        %v1646 = vadd.f32 %v1533, %v1645
        %v1647 = vpop.f32.mrb[0].mxu0
        %v1648 = vadd.f32 %v1535, %v1647
        %v1649 = vpop.f32.mrb[0].mxu0
        %v1650 = vadd.f32 %v1537, %v1649
        %1651 = vmatprep.mubr.bf16.mxu0 %v673
        %1652 = vmatmul.mubr.bf16.gmra.mrb[0].mxu0 %v672
        %v1653 = vpop.f32.mrb[0].mxu0
        %v1654 = vadd.f32 %v1541, %v1653
        %v1655 = vpop.f32.mrb[0].mxu0
        %v1656 = vadd.f32 %v1543, %v1655
        %v1657 = vpop.f32.mrb[0].mxu0
        %v1658 = vadd.f32 %v1545, %v1657
        %v1659 = vpop.f32.mrb[0].mxu0
        %v1660 = vadd.f32 %v1547, %v1659
        %1661 = vmatprep.mubr.bf16.mxu0 %v677
        %1662 = vmatmul.mubr.bf16.gmra.mrb[0].mxu0 %v676
        %v1663 = vpop.f32.mrb[0].mxu0
        %v1664 = vadd.f32 %v1551, %v1663
        %v1665 = vpop.f32.mrb[0].mxu0
        %v1666 = vadd.f32 %v1553, %v1665
        %v1667 = vpop.f32.mrb[0].mxu0
        %v1668 = vadd.f32 %v1555, %v1667
        %v1669 = vpop.f32.mrb[0].mxu0
        %v1670 = vadd.f32 %v1557, %v1669
        %1671 = vdwg.mxu0
        %1672 = vmatprep.subr.bf16.mxu0 %v1193
        %1673 = vmatpush1.bf16.msra.mxu0 %v1192
        %1674 = vmatprep.subr.bf16.mxu0 %v1197
        %1675 = vmatpush1.bf16.msra.mxu0 %v1196
        %1676 = vmatprep.subr.bf16.mxu0 %v1201
        %1677 = vmatpush1.bf16.msra.mxu0 %v1200
        %1678 = vmatprep.subr.bf16.mxu0 %v1205
        %1679 = vmatpush1.bf16.msra.mxu0 %v1204
        %1680 = vmatprep.subr.bf16.mxu0 %v1209
        %1681 = vmatpush1.bf16.msra.mxu0 %v1208
        %1682 = vmatprep.subr.bf16.mxu0 %v1213
        %1683 = vmatpush1.bf16.msra.mxu0 %v1212
        %1684 = vmatprep.subr.bf16.mxu0 %v1217
        %1685 = vmatpush1.bf16.msra.mxu0 %v1216
        %1686 = vmatprep.subr.bf16.mxu0 %v1221
        %1687 = vmatpush1.bf16.msra.mxu0 %v1220
        %1688 = vmatprep.subr.bf16.mxu0 %v1225
        %1689 = vmatpush1.bf16.msra.mxu0 %v1224
        %1690 = vmatprep.subr.bf16.mxu0 %v1229
        %1691 = vmatpush1.bf16.msra.mxu0 %v1228
        %1692 = vmatprep.subr.bf16.mxu0 %v1233
        %1693 = vmatpush1.bf16.msra.mxu0 %v1232
        %1694 = vmatprep.subr.bf16.mxu0 %v1237
        %1695 = vmatpush1.bf16.msra.mxu0 %v1236
        %1696 = vmatprep.subr.bf16.mxu0 %v1241
        %1697 = vmatpush1.bf16.msra.mxu0 %v1240
        %1698 = vmatprep.subr.bf16.mxu0 %v1245
        %1699 = vmatpush1.bf16.msra.mxu0 %v1244
        %1700 = vmatprep.subr.bf16.mxu0 %v1249
        %1701 = vmatpush1.bf16.msra.mxu0 %v1248
        %1702 = vmatprep.subr.bf16.mxu0 %v1253
        %1703 = vmatpush1.bf16.msra.mxu0 %v1252
        %1704 = vmatprep.mubr.bf16.mxu0 %v647
        %1705 = vmatmul.mubr.bf16.gmra.mrb[0].mxu0 %v646
        %v1706 = vpop.f32.mrb[0].mxu0
        %v1707 = vadd.f32 0.0, %v1706
        %v1708 = vpop.f32.mrb[0].mxu0
        %v1709 = vadd.f32 0.0, %v1708
        %v1710 = vpop.f32.mrb[0].mxu0
        %v1711 = vadd.f32 0.0, %v1710
        %v1712 = vpop.f32.mrb[0].mxu0
        %v1713 = vadd.f32 0.0, %v1712
        %1714 = vmatprep.mubr.bf16.mxu0 %v651
        %1715 = vmatmul.mubr.bf16.gmra.mrb[0].mxu0 %v650
        %v1716 = vpop.f32.mrb[0].mxu0
        %v1717 = vadd.f32 0.0, %v1716
        %v1718 = vpop.f32.mrb[0].mxu0
        %v1719 = vadd.f32 0.0, %v1718
        %v1720 = vpop.f32.mrb[0].mxu0
        %v1721 = vadd.f32 0.0, %v1720
        %v1722 = vpop.f32.mrb[0].mxu0
        %v1723 = vadd.f32 0.0, %v1722
        %1724 = vmatprep.mubr.bf16.mxu0 %v655
        %1725 = vmatmul.mubr.bf16.gmra.mrb[0].mxu0 %v654
        %v1726 = vpop.f32.mrb[0].mxu0
        %v1727 = vadd.f32 0.0, %v1726
        %v1728 = vpop.f32.mrb[0].mxu0
        %v1729 = vadd.f32 0.0, %v1728
        %v1730 = vpop.f32.mrb[0].mxu0
        %v1731 = vadd.f32 0.0, %v1730
        %v1732 = vpop.f32.mrb[0].mxu0
        %v1733 = vadd.f32 0.0, %v1732
        %1734 = vmatprep.mubr.bf16.mxu0 %v659
        %1735 = vmatmul.mubr.bf16.gmra.mrb[0].mxu0 %v658
        %v1736 = vpop.f32.mrb[0].mxu0
        %v1737 = vadd.f32 0.0, %v1736
        %v1738 = vpop.f32.mrb[0].mxu0
        %v1739 = vadd.f32 0.0, %v1738
        %v1740 = vpop.f32.mrb[0].mxu0
        %v1741 = vadd.f32 0.0, %v1740
        %v1742 = vpop.f32.mrb[0].mxu0
        %v1743 = vadd.f32 0.0, %v1742
        %1744 = vmatprep.mubr.bf16.mxu0 %v663
        %1745 = vmatmul.mubr.bf16.gmra.mrb[0].mxu0 %v662
        %v1746 = vpop.f32.mrb[0].mxu0
        %v1747 = vadd.f32 0.0, %v1746
        %v1748 = vpop.f32.mrb[0].mxu0
        %v1749 = vadd.f32 0.0, %v1748
        %v1750 = vpop.f32.mrb[0].mxu0
        %v1751 = vadd.f32 0.0, %v1750
        %v1752 = vpop.f32.mrb[0].mxu0
        %v1753 = vadd.f32 0.0, %v1752
        %1754 = vmatprep.mubr.bf16.mxu0 %v667
        %1755 = vmatmul.mubr.bf16.gmra.mrb[0].mxu0 %v666
        %v1756 = vpop.f32.mrb[0].mxu0
        %v1757 = vadd.f32 0.0, %v1756
        %v1758 = vpop.f32.mrb[0].mxu0
        %v1759 = vadd.f32 0.0, %v1758
        %v1760 = vpop.f32.mrb[0].mxu0
        %v1761 = vadd.f32 0.0, %v1760
        %v1762 = vpop.f32.mrb[0].mxu0
        %v1763 = vadd.f32 0.0, %v1762
        %1764 = vmatprep.mubr.bf16.mxu0 %v671
        %1765 = vmatmul.mubr.bf16.gmra.mrb[0].mxu0 %v670
        %v1766 = vpop.f32.mrb[0].mxu0
        %v1767 = vadd.f32 0.0, %v1766
        %v1768 = vpop.f32.mrb[0].mxu0
        %v1769 = vadd.f32 0.0, %v1768
        %v1770 = vpop.f32.mrb[0].mxu0
        %v1771 = vadd.f32 0.0, %v1770
        %v1772 = vpop.f32.mrb[0].mxu0
        %v1773 = vadd.f32 0.0, %v1772
        %1774 = vmatprep.mubr.bf16.mxu0 %v675
        %1775 = vmatmul.mubr.bf16.gmra.mrb[0].mxu0 %v674
        %v1776 = vpop.f32.mrb[0].mxu0
        %v1777 = vadd.f32 0.0, %v1776
        %v1778 = vpop.f32.mrb[0].mxu0
        %v1779 = vadd.f32 0.0, %v1778
        %v1780 = vpop.f32.mrb[0].mxu0
        %v1781 = vadd.f32 0.0, %v1780
        %v1782 = vpop.f32.mrb[0].mxu0
        %v1783 = vadd.f32 0.0, %v1782
        %1784 = vdwg.mxu0
        %1785 = vmatprep.subr.bf16.mxu0 %v1257
        %1786 = vmatpush1.bf16.msra.mxu0 %v1256
        %1787 = vmatprep.subr.bf16.mxu0 %v1261
        %1788 = vmatpush1.bf16.msra.mxu0 %v1260
        %1789 = vmatprep.subr.bf16.mxu0 %v1265
        %1790 = vmatpush1.bf16.msra.mxu0 %v1264
        %1791 = vmatprep.subr.bf16.mxu0 %v1269
        %1792 = vmatpush1.bf16.msra.mxu0 %v1268
        %1793 = vmatprep.subr.bf16.mxu0 %v1273
        %1794 = vmatpush1.bf16.msra.mxu0 %v1272
        %1795 = vmatprep.subr.bf16.mxu0 %v1277
        %1796 = vmatpush1.bf16.msra.mxu0 %v1276
        %1797 = vmatprep.subr.bf16.mxu0 %v1281
        %1798 = vmatpush1.bf16.msra.mxu0 %v1280
        %1799 = vmatprep.subr.bf16.mxu0 %v1285
        %1800 = vmatpush1.bf16.msra.mxu0 %v1284
        %1801 = vmatprep.subr.bf16.mxu0 %v1289
        %1802 = vmatpush1.bf16.msra.mxu0 %v1288
        %1803 = vmatprep.subr.bf16.mxu0 %v1293
        %1804 = vmatpush1.bf16.msra.mxu0 %v1292
        %1805 = vmatprep.subr.bf16.mxu0 %v1297
        %1806 = vmatpush1.bf16.msra.mxu0 %v1296
        %1807 = vmatprep.subr.bf16.mxu0 %v1301
        %1808 = vmatpush1.bf16.msra.mxu0 %v1300
        %1809 = vmatprep.subr.bf16.mxu0 %v1305
        %1810 = vmatpush1.bf16.msra.mxu0 %v1304
        %1811 = vmatprep.subr.bf16.mxu0 %v1309
        %1812 = vmatpush1.bf16.msra.mxu0 %v1308
        %1813 = vmatprep.subr.bf16.mxu0 %v1313
        %1814 = vmatpush1.bf16.msra.mxu0 %v1312
        %1815 = vmatprep.subr.bf16.mxu0 %v1317
        %1816 = vmatpush1.bf16.msra.mxu0 %v1316
        %1817 = vmatprep.mubr.bf16.mxu0 %v649
        %1818 = vmatmul.mubr.bf16.gmra.mrb[0].mxu0 %v648
        %v1819 = vpop.f32.mrb[0].mxu0
        %v1820 = vadd.f32 %v1707, %v1819
        %v1821 = vpop.f32.mrb[0].mxu0
        %v1822 = vadd.f32 %v1709, %v1821
        %v1823 = vpop.f32.mrb[0].mxu0
        %v1824 = vadd.f32 %v1711, %v1823
        %v1825 = vpop.f32.mrb[0].mxu0
        %v1826 = vadd.f32 %v1713, %v1825
        %1827 = vmatprep.mubr.bf16.mxu0 %v653
        %1828 = vmatmul.mubr.bf16.gmra.mrb[0].mxu0 %v652
        %v1829 = vpop.f32.mrb[0].mxu0
        %v1830 = vadd.f32 %v1717, %v1829
        %v1831 = vpop.f32.mrb[0].mxu0
        %v1832 = vadd.f32 %v1719, %v1831
        %v1833 = vpop.f32.mrb[0].mxu0
        %v1834 = vadd.f32 %v1721, %v1833
        %v1835 = vpop.f32.mrb[0].mxu0
        %v1836 = vadd.f32 %v1723, %v1835
        %1837 = vmatprep.mubr.bf16.mxu0 %v657
        %1838 = vmatmul.mubr.bf16.gmra.mrb[0].mxu0 %v656
        %v1839 = vpop.f32.mrb[0].mxu0
        %v1840 = vadd.f32 %v1727, %v1839
        %v1841 = vpop.f32.mrb[0].mxu0
        %v1842 = vadd.f32 %v1729, %v1841
        %v1843 = vpop.f32.mrb[0].mxu0
        %v1844 = vadd.f32 %v1731, %v1843
        %v1845 = vpop.f32.mrb[0].mxu0
        %v1846 = vadd.f32 %v1733, %v1845
        %1847 = vmatprep.mubr.bf16.mxu0 %v661
        %1848 = vmatmul.mubr.bf16.gmra.mrb[0].mxu0 %v660
        %v1849 = vpop.f32.mrb[0].mxu0
        %v1850 = vadd.f32 %v1737, %v1849
        %v1851 = vpop.f32.mrb[0].mxu0
        %v1852 = vadd.f32 %v1739, %v1851
        %v1853 = vpop.f32.mrb[0].mxu0
        %v1854 = vadd.f32 %v1741, %v1853
        %v1855 = vpop.f32.mrb[0].mxu0
        %v1856 = vadd.f32 %v1743, %v1855
        %1857 = vmatprep.mubr.bf16.mxu0 %v665
        %1858 = vmatmul.mubr.bf16.gmra.mrb[0].mxu0 %v664
        %v1859 = vpop.f32.mrb[0].mxu0
        %v1860 = vadd.f32 %v1747, %v1859
        %v1861 = vpop.f32.mrb[0].mxu0
        %v1862 = vadd.f32 %v1749, %v1861
        %v1863 = vpop.f32.mrb[0].mxu0
        %v1864 = vadd.f32 %v1751, %v1863
        %v1865 = vpop.f32.mrb[0].mxu0
        %v1866 = vadd.f32 %v1753, %v1865
        %1867 = vmatprep.mubr.bf16.mxu0 %v669
        %1868 = vmatmul.mubr.bf16.gmra.mrb[0].mxu0 %v668
        %v1869 = vpop.f32.mrb[0].mxu0
        %v1870 = vadd.f32 %v1757, %v1869
        %v1871 = vpop.f32.mrb[0].mxu0
        %v1872 = vadd.f32 %v1759, %v1871
        %v1873 = vpop.f32.mrb[0].mxu0
        %v1874 = vadd.f32 %v1761, %v1873
        %v1875 = vpop.f32.mrb[0].mxu0
        %v1876 = vadd.f32 %v1763, %v1875
        %1877 = vmatprep.mubr.bf16.mxu0 %v673
        %1878 = vmatmul.mubr.bf16.gmra.mrb[0].mxu0 %v672
        %v1879 = vpop.f32.mrb[0].mxu0
        %v1880 = vadd.f32 %v1767, %v1879
        %v1881 = vpop.f32.mrb[0].mxu0
        %v1882 = vadd.f32 %v1769, %v1881
        %v1883 = vpop.f32.mrb[0].mxu0
        %v1884 = vadd.f32 %v1771, %v1883
        %v1885 = vpop.f32.mrb[0].mxu0
        %v1886 = vadd.f32 %v1773, %v1885
        %1887 = vmatprep.mubr.bf16.mxu0 %v677
        %1888 = vmatmul.mubr.bf16.gmra.mrb[0].mxu0 %v676
        %v1889 = vpop.f32.mrb[0].mxu0
        %v1890 = vadd.f32 %v1777, %v1889
        %v1891 = vpop.f32.mrb[0].mxu0
        %v1892 = vadd.f32 %v1779, %v1891
        %v1893 = vpop.f32.mrb[0].mxu0
        %v1894 = vadd.f32 %v1781, %v1893
        %v1895 = vpop.f32.mrb[0].mxu0
        %v1896 = vadd.f32 %v1783, %v1895
        %1897 = vdwg.mxu0
        %v1898 = vpack.c.bf16 %v1598, %v1594
        %v1899 = vpack.c.bf16 %v1600, %v1596
        %v1900 = vpack.c.bf16 %v1824, %v1820
        %v1901 = vpack.c.bf16 %v1826, %v1822
        %v1902 = vpack.c.bf16 %v1608, %v1604
        %v1903 = vpack.c.bf16 %v1610, %v1606
        %v1904 = vpack.c.bf16 %v1834, %v1830
        %v1905 = vpack.c.bf16 %v1836, %v1832
        %v1906 = vpack.c.bf16 %v1618, %v1614
        %v1907 = vpack.c.bf16 %v1620, %v1616
        %v1908 = vpack.c.bf16 %v1844, %v1840
        %v1909 = vpack.c.bf16 %v1846, %v1842
        %v1910 = vpack.c.bf16 %v1628, %v1624
        %v1911 = vpack.c.bf16 %v1630, %v1626
        %v1912 = vpack.c.bf16 %v1854, %v1850
        %v1913 = vpack.c.bf16 %v1856, %v1852
        %v1914 = vpack.c.bf16 %v1638, %v1634
        %v1915 = vpack.c.bf16 %v1640, %v1636
        %v1916 = vpack.c.bf16 %v1864, %v1860
        %v1917 = vpack.c.bf16 %v1866, %v1862
        %v1918 = vpack.c.bf16 %v1648, %v1644
        %v1919 = vpack.c.bf16 %v1650, %v1646
        %v1920 = vpack.c.bf16 %v1874, %v1870
        %v1921 = vpack.c.bf16 %v1876, %v1872
        %v1922 = vpack.c.bf16 %v1658, %v1654
        %v1923 = vpack.c.bf16 %v1660, %v1656
        %v1924 = vpack.c.bf16 %v1884, %v1880
        %v1925 = vpack.c.bf16 %v1886, %v1882
        %v1926 = vpack.c.bf16 %v1668, %v1664
        %v1927 = vpack.c.bf16 %v1670, %v1666
        %v1928 = vpack.c.bf16 %v1894, %v1890
        %v1929 = vpack.c.bf16 %v1896, %v1892
        %v1930 = vtanh.bf16.pop %v1898
        %v1931 = vtanh.bf16.pop %v1899
        %v1932 = vtanh.bf16.pop %v1900
        %v1933 = vtanh.bf16.pop %v1901
        %v1934 = vtanh.bf16.pop %v1902
        %v1935 = vtanh.bf16.pop %v1903
        %v1936 = vtanh.bf16.pop %v1904
        %v1937 = vtanh.bf16.pop %v1905
        %v1938 = vtanh.bf16.pop %v1906
        %v1939 = vtanh.bf16.pop %v1907
        %v1940 = vtanh.bf16.pop %v1908
        %v1941 = vtanh.bf16.pop %v1909
        %v1942 = vtanh.bf16.pop %v1910
        %v1943 = vtanh.bf16.pop %v1911
        %v1944 = vtanh.bf16.pop %v1912
        %v1945 = vtanh.bf16.pop %v1913
        %v1946 = vtanh.bf16.pop %v1914
        %v1947 = vtanh.bf16.pop %v1915
        %v1948 = vtanh.bf16.pop %v1916
        %v1949 = vtanh.bf16.pop %v1917
        %v1950 = vtanh.bf16.pop %v1918
        %v1951 = vtanh.bf16.pop %v1919
        %v1952 = vtanh.bf16.pop %v1920
        %v1953 = vtanh.bf16.pop %v1921
        %v1954 = vtanh.bf16.pop %v1922
        %v1955 = vtanh.bf16.pop %v1923
        %v1956 = vtanh.bf16.pop %v1924
        %v1957 = vtanh.bf16.pop %v1925
        %v1958 = vtanh.bf16.pop %v1926
        %v1959 = vtanh.bf16.pop %v1927
        %v1960 = vtanh.bf16.pop %v1928
        %v1961 = vtanh.bf16.pop %v1929
        %v1962 = vld [vmem:[%s3] sm:$0xf]
        %v1963 = vld [vmem:[%s3 + $0x4] sm:$0xf]
        %v1964 = vld [vmem:[%s3 + $0x8] sm:$0xf]
        %v1965 = vld [vmem:[%s3 + $0xc] sm:$0xf]
        %v1966 = vld [vmem:[%s3 + $0x10] sm:$0xf]
        %v1967 = vld [vmem:[%s3 + $0x14] sm:$0xf]
        %v1968 = vld [vmem:[%s3 + $0x18] sm:$0xf]
        %v1969 = vld [vmem:[%s3 + $0x1c] sm:$0xf]
        %v1970 = vld [vmem:[%s3 + $0x20] sm:$0xf]
        %v1971 = vld [vmem:[%s3 + $0x24] sm:$0xf]
        %v1972 = vld [vmem:[%s3 + $0x28] sm:$0xf]
        %v1973 = vld [vmem:[%s3 + $0x2c] sm:$0xf]
        %v1974 = vld [vmem:[%s3 + $0x30] sm:$0xf]
        %v1975 = vld [vmem:[%s3 + $0x34] sm:$0xf]
        %v1976 = vld [vmem:[%s3 + $0x38] sm:$0xf]
        %v1977 = vld [vmem:[%s3 + $0x3c] sm:$0xf]
        %v1978 = vld [vmem:[%s3 + $0x40] sm:$0xf]
        %v1979 = vld [vmem:[%s3 + $0x44] sm:$0xf]
        %v1980 = vld [vmem:[%s3 + $0x48] sm:$0xf]
        %v1981 = vld [vmem:[%s3 + $0x4c] sm:$0xf]
        %v1982 = vld [vmem:[%s3 + $0x50] sm:$0xf]
        %v1983 = vld [vmem:[%s3 + $0x54] sm:$0xf]
        %v1984 = vld [vmem:[%s3 + $0x58] sm:$0xf]
        %v1985 = vld [vmem:[%s3 + $0x5c] sm:$0xf]
        %v1986 = vld [vmem:[%s3 + $0x60] sm:$0xf]
        %v1987 = vld [vmem:[%s3 + $0x64] sm:$0xf]
        %v1988 = vld [vmem:[%s3 + $0x68] sm:$0xf]
        %v1989 = vld [vmem:[%s3 + $0x6c] sm:$0xf]
        %v1990 = vld [vmem:[%s3 + $0x70] sm:$0xf]
        %v1991 = vld [vmem:[%s3 + $0x74] sm:$0xf]
        %v1992 = vld [vmem:[%s3 + $0x78] sm:$0xf]
        %v1993 = vld [vmem:[%s3 + $0x7c] sm:$0xf]
        %v1994 = vld [vmem:[%s3 + $0x80] sm:$0xf]
        %v1995 = vld [vmem:[%s3 + $0x84] sm:$0xf]
        %v1996 = vld [vmem:[%s3 + $0x88] sm:$0xf]
        %v1997 = vld [vmem:[%s3 + $0x8c] sm:$0xf]
        %v1998 = vld [vmem:[%s3 + $0x90] sm:$0xf]
        %v1999 = vld [vmem:[%s3 + $0x94] sm:$0xf]
        %v2000 = vld [vmem:[%s3 + $0x98] sm:$0xf]
        %v2001 = vld [vmem:[%s3 + $0x9c] sm:$0xf]
        %v2002 = vld [vmem:[%s3 + $0xa0] sm:$0xf]
        %v2003 = vld [vmem:[%s3 + $0xa4] sm:$0xf]
        %v2004 = vld [vmem:[%s3 + $0xa8] sm:$0xf]
        %v2005 = vld [vmem:[%s3 + $0xac] sm:$0xf]
        %v2006 = vld [vmem:[%s3 + $0xb0] sm:$0xf]
        %v2007 = vld [vmem:[%s3 + $0xb4] sm:$0xf]
        %v2008 = vld [vmem:[%s3 + $0xb8] sm:$0xf]
        %v2009 = vld [vmem:[%s3 + $0xbc] sm:$0xf]
        %v2010 = vld [vmem:[%s3 + $0xc0] sm:$0xf]
        %v2011 = vld [vmem:[%s3 + $0xc4] sm:$0xf]
        %v2012 = vld [vmem:[%s3 + $0xc8] sm:$0xf]
        %v2013 = vld [vmem:[%s3 + $0xcc] sm:$0xf]
        %v2014 = vld [vmem:[%s3 + $0xd0] sm:$0xf]
        %v2015 = vld [vmem:[%s3 + $0xd4] sm:$0xf]
        %v2016 = vld [vmem:[%s3 + $0xd8] sm:$0xf]
        %v2017 = vld [vmem:[%s3 + $0xdc] sm:$0xf]
        %v2018 = vld [vmem:[%s3 + $0xe0] sm:$0xf]
        %v2019 = vld [vmem:[%s3 + $0xe4] sm:$0xf]
        %v2020 = vld [vmem:[%s3 + $0xe8] sm:$0xf]
        %v2021 = vld [vmem:[%s3 + $0xec] sm:$0xf]
        %v2022 = vld [vmem:[%s3 + $0xf0] sm:$0xf]
        %v2023 = vld [vmem:[%s3 + $0xf4] sm:$0xf]
        %v2024 = vld [vmem:[%s3 + $0xf8] sm:$0xf]
        %v2025 = vld [vmem:[%s3 + $0xfc] sm:$0xf]
        %v2090 = vunpack.c.l.b16 %v1962
        %v2091 = vunpack.c.l.b16 %v1963
        %v2092 = vunpack.c.l.b16 %v1964
        %v2093 = vunpack.c.l.b16 %v1965
        %v2094 = vunpack.c.l.b16 %v1966
        %v2095 = vunpack.c.l.b16 %v1967
        %v2096 = vunpack.c.l.b16 %v1968
        %v2097 = vunpack.c.l.b16 %v1969
        %v2098 = vunpack.c.l.b16 %v1970
        %v2099 = vunpack.c.l.b16 %v1971
        %v2100 = vunpack.c.l.b16 %v1972
        %v2101 = vunpack.c.l.b16 %v1973
        %v2102 = vunpack.c.l.b16 %v1974
        %v2103 = vunpack.c.l.b16 %v1975
        %v2104 = vunpack.c.l.b16 %v1976
        %v2105 = vunpack.c.l.b16 %v1977
        %v2106 = vunpack.c.l.b16 %v1978
        %v2107 = vunpack.c.l.b16 %v1979
        %v2108 = vunpack.c.l.b16 %v1980
        %v2109 = vunpack.c.l.b16 %v1981
        %v2110 = vunpack.c.l.b16 %v1982
        %v2111 = vunpack.c.l.b16 %v1983
        %v2112 = vunpack.c.l.b16 %v1984
        %v2113 = vunpack.c.l.b16 %v1985
        %v2114 = vunpack.c.l.b16 %v1986
        %v2115 = vunpack.c.l.b16 %v1987
        %v2116 = vunpack.c.l.b16 %v1988
        %v2117 = vunpack.c.l.b16 %v1989
        %v2118 = vunpack.c.l.b16 %v1990
        %v2119 = vunpack.c.l.b16 %v1991
        %v2120 = vunpack.c.l.b16 %v1992
        %v2121 = vunpack.c.l.b16 %v1993
        %v2122 = vunpack.c.l.b16 %v1994
        %v2123 = vunpack.c.l.b16 %v1995
        %v2124 = vunpack.c.l.b16 %v1996
        %v2125 = vunpack.c.l.b16 %v1997
        %v2126 = vunpack.c.l.b16 %v1998
        %v2127 = vunpack.c.l.b16 %v1999
        %v2128 = vunpack.c.l.b16 %v2000
        %v2129 = vunpack.c.l.b16 %v2001
        %v2130 = vunpack.c.l.b16 %v2002
        %v2131 = vunpack.c.l.b16 %v2003
        %v2132 = vunpack.c.l.b16 %v2004
        %v2133 = vunpack.c.l.b16 %v2005
        %v2134 = vunpack.c.l.b16 %v2006
        %v2135 = vunpack.c.l.b16 %v2007
        %v2136 = vunpack.c.l.b16 %v2008
        %v2137 = vunpack.c.l.b16 %v2009
        %v2138 = vunpack.c.l.b16 %v2010
        %v2139 = vunpack.c.l.b16 %v2011
        %v2140 = vunpack.c.l.b16 %v2012
        %v2141 = vunpack.c.l.b16 %v2013
        %v2142 = vunpack.c.l.b16 %v2014
        %v2143 = vunpack.c.l.b16 %v2015
        %v2144 = vunpack.c.l.b16 %v2016
        %v2145 = vunpack.c.l.b16 %v2017
        %v2146 = vunpack.c.l.b16 %v2018
        %v2147 = vunpack.c.l.b16 %v2019
        %v2148 = vunpack.c.l.b16 %v2020
        %v2149 = vunpack.c.l.b16 %v2021
        %v2150 = vunpack.c.l.b16 %v2022
        %v2151 = vunpack.c.l.b16 %v2023
        %v2152 = vunpack.c.l.b16 %v2024
        %v2153 = vunpack.c.l.b16 %v2025
        %v2154 = vpack.c.b16 %v2091, %v2090
        %v2155 = vpack.c.b16 %v2093, %v2092
        %v2156 = vpack.c.b16 %v2095, %v2094
        %v2157 = vpack.c.b16 %v2097, %v2096
        %v2158 = vpack.c.b16 %v2099, %v2098
        %v2159 = vpack.c.b16 %v2101, %v2100
        %v2160 = vpack.c.b16 %v2103, %v2102
        %v2161 = vpack.c.b16 %v2105, %v2104
        %v2162 = vpack.c.b16 %v2107, %v2106
        %v2163 = vpack.c.b16 %v2109, %v2108
        %v2164 = vpack.c.b16 %v2111, %v2110
        %v2165 = vpack.c.b16 %v2113, %v2112
        %v2166 = vpack.c.b16 %v2115, %v2114
        %v2167 = vpack.c.b16 %v2117, %v2116
        %v2168 = vpack.c.b16 %v2119, %v2118
        %v2169 = vpack.c.b16 %v2121, %v2120
        %v2170 = vpack.c.b16 %v2123, %v2122
        %v2171 = vpack.c.b16 %v2125, %v2124
        %v2172 = vpack.c.b16 %v2127, %v2126
        %v2173 = vpack.c.b16 %v2129, %v2128
        %v2174 = vpack.c.b16 %v2131, %v2130
        %v2175 = vpack.c.b16 %v2133, %v2132
        %v2176 = vpack.c.b16 %v2135, %v2134
        %v2177 = vpack.c.b16 %v2137, %v2136
        %v2178 = vpack.c.b16 %v2139, %v2138
        %v2179 = vpack.c.b16 %v2141, %v2140
        %v2180 = vpack.c.b16 %v2143, %v2142
        %v2181 = vpack.c.b16 %v2145, %v2144
        %v2182 = vpack.c.b16 %v2147, %v2146
        %v2183 = vpack.c.b16 %v2149, %v2148
        %v2184 = vpack.c.b16 %v2151, %v2150
        %v2185 = vpack.c.b16 %v2153, %v2152
        %2218 = vmatprep.subr.bf16.mxu0 0
        %2219 = vmatpush1.bf16.msra.mxu0 %v2154
        %2220 = vmatprep.subr.bf16.mxu0 0
        %2221 = vmatpush1.bf16.msra.mxu0 %v2155
        %2222 = vmatprep.subr.bf16.mxu0 0
        %2223 = vmatpush1.bf16.msra.mxu0 %v2156
        %2224 = vmatprep.subr.bf16.mxu0 0
        %2225 = vmatpush1.bf16.msra.mxu0 %v2157
        %2226 = vmatprep.subr.bf16.mxu0 0
        %2227 = vmatpush1.bf16.msra.mxu0 %v2158
        %2228 = vmatprep.subr.bf16.mxu0 0
        %2229 = vmatpush1.bf16.msra.mxu0 %v2159
        %2230 = vmatprep.subr.bf16.mxu0 0
        %2231 = vmatpush1.bf16.msra.mxu0 %v2160
        %2232 = vmatprep.subr.bf16.mxu0 0
        %2233 = vmatpush1.bf16.msra.mxu0 %v2161
        %2234 = vmatprep.subr.bf16.mxu0 0
        %2235 = vmatpush1.bf16.msra.mxu0 %v2162
        %2236 = vmatprep.subr.bf16.mxu0 0
        %2237 = vmatpush1.bf16.msra.mxu0 %v2163
        %2238 = vmatprep.subr.bf16.mxu0 0
        %2239 = vmatpush1.bf16.msra.mxu0 %v2164
        %2240 = vmatprep.subr.bf16.mxu0 0
        %2241 = vmatpush1.bf16.msra.mxu0 %v2165
        %2242 = vmatprep.subr.bf16.mxu0 0
        %2243 = vmatpush1.bf16.msra.mxu0 %v2166
        %2244 = vmatprep.subr.bf16.mxu0 0
        %2245 = vmatpush1.bf16.msra.mxu0 %v2167
        %2246 = vmatprep.subr.bf16.mxu0 0
        %2247 = vmatpush1.bf16.msra.mxu0 %v2168
        %2248 = vmatprep.subr.bf16.mxu0 0
        %2249 = vmatpush1.bf16.msra.mxu0 %v2169
        %2250 = vmatprep.mubr.bf16.mxu0 %v1931
        %2251 = vmatmul.mubr.bf16.gmra.mrb[0].mxu0 %v1930
        %v2252 = vpop.f32.mrb[0].mxu0
        %v2253 = vadd.f32 0.0, %v2252
        %v2254 = vpop.f32.mrb[0].mxu0
        %v2255 = vpop.f32.mrb[0].mxu0
        %v2256 = vadd.f32 0.0, %v2255
        %v2257 = vpop.f32.mrb[0].mxu0
        %2258 = vmatprep.mubr.bf16.mxu0 %v1935
        %2259 = vmatmul.mubr.bf16.gmra.mrb[0].mxu0 %v1934
        %v2260 = vpop.f32.mrb[0].mxu0
        %v2261 = vadd.f32 0.0, %v2260
        %v2262 = vpop.f32.mrb[0].mxu0
        %v2263 = vpop.f32.mrb[0].mxu0
        %v2264 = vadd.f32 0.0, %v2263
        %v2265 = vpop.f32.mrb[0].mxu0
        %2266 = vmatprep.mubr.bf16.mxu0 %v1939
        %2267 = vmatmul.mubr.bf16.gmra.mrb[0].mxu0 %v1938
        %v2268 = vpop.f32.mrb[0].mxu0
        %v2269 = vadd.f32 0.0, %v2268
        %v2270 = vpop.f32.mrb[0].mxu0
        %v2271 = vpop.f32.mrb[0].mxu0
        %v2272 = vadd.f32 0.0, %v2271
        %v2273 = vpop.f32.mrb[0].mxu0
        %2274 = vmatprep.mubr.bf16.mxu0 %v1943
        %2275 = vmatmul.mubr.bf16.gmra.mrb[0].mxu0 %v1942
        %v2276 = vpop.f32.mrb[0].mxu0
        %v2277 = vadd.f32 0.0, %v2276
        %v2278 = vpop.f32.mrb[0].mxu0
        %v2279 = vpop.f32.mrb[0].mxu0
        %v2280 = vadd.f32 0.0, %v2279
        %v2281 = vpop.f32.mrb[0].mxu0
        %2282 = vmatprep.mubr.bf16.mxu0 %v1947
        %2283 = vmatmul.mubr.bf16.gmra.mrb[0].mxu0 %v1946
        %v2284 = vpop.f32.mrb[0].mxu0
        %v2285 = vadd.f32 0.0, %v2284
        %v2286 = vpop.f32.mrb[0].mxu0
        %v2287 = vpop.f32.mrb[0].mxu0
        %v2288 = vadd.f32 0.0, %v2287
        %v2289 = vpop.f32.mrb[0].mxu0
        %2290 = vmatprep.mubr.bf16.mxu0 %v1951
        %2291 = vmatmul.mubr.bf16.gmra.mrb[0].mxu0 %v1950
        %v2292 = vpop.f32.mrb[0].mxu0
        %v2293 = vadd.f32 0.0, %v2292
        %v2294 = vpop.f32.mrb[0].mxu0
        %v2295 = vpop.f32.mrb[0].mxu0
        %v2296 = vadd.f32 0.0, %v2295
        %v2297 = vpop.f32.mrb[0].mxu0
        %2298 = vmatprep.mubr.bf16.mxu0 %v1955
        %2299 = vmatmul.mubr.bf16.gmra.mrb[0].mxu0 %v1954
        %v2300 = vpop.f32.mrb[0].mxu0
        %v2301 = vadd.f32 0.0, %v2300
        %v2302 = vpop.f32.mrb[0].mxu0
        %v2303 = vpop.f32.mrb[0].mxu0
        %v2304 = vadd.f32 0.0, %v2303
        %v2305 = vpop.f32.mrb[0].mxu0
        %2306 = vmatprep.mubr.bf16.mxu0 %v1959
        %2307 = vmatmul.mubr.bf16.gmra.mrb[0].mxu0 %v1958
        %v2308 = vpop.f32.mrb[0].mxu0
        %v2309 = vadd.f32 0.0, %v2308
        %v2310 = vpop.f32.mrb[0].mxu0
        %v2311 = vpop.f32.mrb[0].mxu0
        %v2312 = vadd.f32 0.0, %v2311
        %v2313 = vpop.f32.mrb[0].mxu0
        %2314 = vdwg.mxu0
        %2315 = vmatprep.subr.bf16.mxu0 0
        %2316 = vmatpush1.bf16.msra.mxu0 %v2170
        %2317 = vmatprep.subr.bf16.mxu0 0
        %2318 = vmatpush1.bf16.msra.mxu0 %v2171
        %2319 = vmatprep.subr.bf16.mxu0 0
        %2320 = vmatpush1.bf16.msra.mxu0 %v2172
        %2321 = vmatprep.subr.bf16.mxu0 0
        %2322 = vmatpush1.bf16.msra.mxu0 %v2173
        %2323 = vmatprep.subr.bf16.mxu0 0
        %2324 = vmatpush1.bf16.msra.mxu0 %v2174
        %2325 = vmatprep.subr.bf16.mxu0 0
        %2326 = vmatpush1.bf16.msra.mxu0 %v2175
        %2327 = vmatprep.subr.bf16.mxu0 0
        %2328 = vmatpush1.bf16.msra.mxu0 %v2176
        %2329 = vmatprep.subr.bf16.mxu0 0
        %2330 = vmatpush1.bf16.msra.mxu0 %v2177
        %2331 = vmatprep.subr.bf16.mxu0 0
        %2332 = vmatpush1.bf16.msra.mxu0 %v2178
        %2333 = vmatprep.subr.bf16.mxu0 0
        %2334 = vmatpush1.bf16.msra.mxu0 %v2179
        %2335 = vmatprep.subr.bf16.mxu0 0
        %2336 = vmatpush1.bf16.msra.mxu0 %v2180
        %2337 = vmatprep.subr.bf16.mxu0 0
        %2338 = vmatpush1.bf16.msra.mxu0 %v2181
        %2339 = vmatprep.subr.bf16.mxu0 0
        %2340 = vmatpush1.bf16.msra.mxu0 %v2182
        %2341 = vmatprep.subr.bf16.mxu0 0
        %2342 = vmatpush1.bf16.msra.mxu0 %v2183
        %2343 = vmatprep.subr.bf16.mxu0 0
        %2344 = vmatpush1.bf16.msra.mxu0 %v2184
        %2345 = vmatprep.subr.bf16.mxu0 0
        %2346 = vmatpush1.bf16.msra.mxu0 %v2185
        %2347 = vmatprep.mubr.bf16.mxu0 %v1933
        %2348 = vmatmul.mubr.bf16.gmra.mrb[0].mxu0 %v1932
        %v2349 = vpop.f32.mrb[0].mxu0
        %v2350 = vadd.f32 %v2253, %v2349
        %v2351 = vpop.f32.mrb[0].mxu0
        %v2352 = vpop.f32.mrb[0].mxu0
        %v2353 = vadd.f32 %v2256, %v2352
        %v2354 = vpop.f32.mrb[0].mxu0
        %2355 = vmatprep.mubr.bf16.mxu0 %v1937
        %2356 = vmatmul.mubr.bf16.gmra.mrb[0].mxu0 %v1936
        %v2357 = vpop.f32.mrb[0].mxu0
        %v2358 = vadd.f32 %v2261, %v2357
        %v2359 = vpop.f32.mrb[0].mxu0
        %v2360 = vpop.f32.mrb[0].mxu0
        %v2361 = vadd.f32 %v2264, %v2360
        %v2362 = vpop.f32.mrb[0].mxu0
        %2363 = vmatprep.mubr.bf16.mxu0 %v1941
        %2364 = vmatmul.mubr.bf16.gmra.mrb[0].mxu0 %v1940
        %v2365 = vpop.f32.mrb[0].mxu0
        %v2366 = vadd.f32 %v2269, %v2365
        %v2367 = vpop.f32.mrb[0].mxu0
        %v2368 = vpop.f32.mrb[0].mxu0
        %v2369 = vadd.f32 %v2272, %v2368
        %v2370 = vpop.f32.mrb[0].mxu0
        %2371 = vmatprep.mubr.bf16.mxu0 %v1945
        %2372 = vmatmul.mubr.bf16.gmra.mrb[0].mxu0 %v1944
        %v2373 = vpop.f32.mrb[0].mxu0
        %v2374 = vadd.f32 %v2277, %v2373
        %v2375 = vpop.f32.mrb[0].mxu0
        %v2376 = vpop.f32.mrb[0].mxu0
        %v2377 = vadd.f32 %v2280, %v2376
        %v2378 = vpop.f32.mrb[0].mxu0
        %2379 = vmatprep.mubr.bf16.mxu0 %v1949
        %2380 = vmatmul.mubr.bf16.gmra.mrb[0].mxu0 %v1948
        %v2381 = vpop.f32.mrb[0].mxu0
        %v2382 = vadd.f32 %v2285, %v2381
        %v2383 = vpop.f32.mrb[0].mxu0
        %v2384 = vpop.f32.mrb[0].mxu0
        %v2385 = vadd.f32 %v2288, %v2384
        %v2386 = vpop.f32.mrb[0].mxu0
        %2387 = vmatprep.mubr.bf16.mxu0 %v1953
        %2388 = vmatmul.mubr.bf16.gmra.mrb[0].mxu0 %v1952
        %v2389 = vpop.f32.mrb[0].mxu0
        %v2390 = vadd.f32 %v2293, %v2389
        %v2391 = vpop.f32.mrb[0].mxu0
        %v2392 = vpop.f32.mrb[0].mxu0
        %v2393 = vadd.f32 %v2296, %v2392
        %v2394 = vpop.f32.mrb[0].mxu0
        %2395 = vmatprep.mubr.bf16.mxu0 %v1957
        %2396 = vmatmul.mubr.bf16.gmra.mrb[0].mxu0 %v1956
        %v2397 = vpop.f32.mrb[0].mxu0
        %v2398 = vadd.f32 %v2301, %v2397
        %v2399 = vpop.f32.mrb[0].mxu0
        %v2400 = vpop.f32.mrb[0].mxu0
        %v2401 = vadd.f32 %v2304, %v2400
        %v2402 = vpop.f32.mrb[0].mxu0
        %2403 = vmatprep.mubr.bf16.mxu0 %v1961
        %2404 = vmatmul.mubr.bf16.gmra.mrb[0].mxu0 %v1960
        %v2405 = vpop.f32.mrb[0].mxu0
        %v2406 = vadd.f32 %v2309, %v2405
        %v2407 = vpop.f32.mrb[0].mxu0
        %v2408 = vpop.f32.mrb[0].mxu0
        %v2409 = vadd.f32 %v2312, %v2408
        %v2410 = vpop.f32.mrb[0].mxu0
        %2411 = vdwg.mxu0
        %vm2412 = vcmask 15360
        %2413 = vst.msk [vmem:[%s214] sm:$0xff] %vm2412, %v2350
        %2414 = vst.msk [vmem:[%s214 + $0x8] sm:$0xff] %vm2412, %v2353
        %2415 = vst.msk [vmem:[%s214 + $0x10] sm:$0xff] %vm2412, %v2358
        %2416 = vst.msk [vmem:[%s214 + $0x18] sm:$0xff] %vm2412, %v2361
        %2417 = vst.msk [vmem:[%s214 + $0x20] sm:$0xff] %vm2412, %v2366
        %2418 = vst.msk [vmem:[%s214 + $0x28] sm:$0xff] %vm2412, %v2369
        %2419 = vst.msk [vmem:[%s214 + $0x30] sm:$0xff] %vm2412, %v2374
        %2420 = vst.msk [vmem:[%s214 + $0x38] sm:$0xff] %vm2412, %v2377
        %2421 = vst.msk [vmem:[%s214 + $0x40] sm:$0xff] %vm2412, %v2382
        %2422 = vst.msk [vmem:[%s214 + $0x48] sm:$0xff] %vm2412, %v2385
        %2423 = vst.msk [vmem:[%s214 + $0x50] sm:$0xff] %vm2412, %v2390
        %2424 = vst.msk [vmem:[%s214 + $0x58] sm:$0xff] %vm2412, %v2393
        %2425 = vst.msk [vmem:[%s214 + $0x60] sm:$0xff] %vm2412, %v2398
        %2426 = vst.msk [vmem:[%s214 + $0x68] sm:$0xff] %vm2412, %v2401
        %2427 = vst.msk [vmem:[%s214 + $0x70] sm:$0xff] %vm2412, %v2406
        %2428 = vst.msk [vmem:[%s214 + $0x78] sm:$0xff] %vm2412, %v2409
        %s2429 = smul.u32 16, %s16
        %p2430 = scmp.lt.s32.totalorder %s2429, 47
        %s2431 = scalar_select %p2430, %s2429, 47
        %s2432 = smul.addr %s2431, 8
        %s2433 = scalar_lea.vmem %s4, %s2432
        // Predicated region
        $region41: #{netf_forward.1} parent=35 // pred_check
          %p2434 = pneg %p123
        $region42: #{netf_forward.1} parent=35 // pred_check_branch
          %2436 = sbr.rel (%p2434) target = $region44
        $region43: #{netf_forward.1} parent=35 // pred_region
          %s2437 = smul.u32 16, %s16
        $region44: #{netf_forward.1} parent=35 // pred_fallthru
          _
      $region36: #{netf_forward.1} parent=5 // pred_fallthru
        _
      %p2438 = scmp.le.s32.totalorder 2, %s11
      // Predicated region
      $region45: #{netf_forward.1} parent=5 // pred_check
        %p2439 = pneg %p2438
      $region46: #{netf_forward.1} parent=5 // pred_check_branch
        %2441 = sbr.rel (%p2439) target = $region48
      $region47: #{netf_forward.1} parent=5 // pred_region
        %s2442 = ssub.s32 %s11, 2
        // Predicated region
        $region49: #{netf_forward.1} parent=47 // pred_check
          %p2443 = pneg %p129
        $region50: #{netf_forward.1} parent=47 // pred_check_branch
          %2445 = sbr.rel (%p2443) target = $region52
        $region51: #{netf_forward.1} parent=47 // pred_region
          %s2446 = smul.u32 16, %s17
          %p2447 = scmp.lt.s32.totalorder %s2446, 47
          %s2448 = scalar_select %p2447, %s2446, 47
          %s2449 = smul.addr %s2448, 8
          %s2450 = scalar_lea.vmem %s4, %s2449
        $region52: #{netf_forward.1} parent=47 // pred_fallthru
          _
      $region48: #{netf_forward.1} parent=5 // pred_fallthru
        _
    $region6: #{netf_forward.1} parent=1 // loop_footer
      %s15 = sadd.s32 1, %s11
    $region7: #{netf_forward.1} parent=1 // loop_footer_branch
      %10 = sbr.rel target = $region3
    $region8: #{netf_forward.1} parent=1 // loop_exit
      _
    %2451 = vsyncpa [#allocation3], 1
    %s2452 = scalar_lea.sflag [#allocation3], 1
    %2453 = vsyncpa %s2452, 1

</llo_original>
